<compile_context>
chip_gen: v6e
topology: v6e:2x2x1
jax: 0.10.0
libtpu: 0.0.40
codegen_flags: <defaults>
</compile_context>

<pallas_src>
import jax
import jax.numpy as jnp
from jax.experimental import pallas as pl
from jax.experimental.pallas import tpu as pltpu


# ----------------------------- Pallas kernels -----------------------------

def conv_relu_pool_kernel(p_ref, w_ref, b_ref, out_ref):
    """Fused conv2d(1->32, 3x3, pad=1) + ReLU + MaxPool2d(2,2).

    p_ref:   (M, 16)   4x4 / stride-2 patches of the padded image, M = N*14*14,
                       rows ordered (n, pooled_h, pooled_w), cols = 4*a + b.
    w_ref:   (16, 128) packed conv weight: column block 32*q + c holds the taps
                       of output channel c evaluated at pool-window position q.
    b_ref:   (1, 32)   conv bias.
    out_ref: (M, 32)   pooled activations (rows (n,ph,pw), lanes = channel).
    """
    # One lane-dense MXU matmul instead of four lane-sparse ones.
    z = jnp.dot(p_ref[...], w_ref[...], preferred_element_type=jnp.float32)  # (M,128)
    # Max over the four pool-window positions (32-lane column groups).
    m = jnp.maximum(jnp.maximum(z[:, 0:32], z[:, 32:64]),
                    jnp.maximum(z[:, 64:96], z[:, 96:128]))
    # relu(max(conv) + b) == maxpool(relu(conv + b)) since bias is shared
    # across the window and relu is monotonic.
    out_ref[...] = jnp.maximum(m + b_ref[...], 0.0)


def mlp_kernel(x_ref, w1_ref, b1_ref, w2_ref, b2_ref, out_ref, acc_ref):
    """Fused fc1 (6272->128) + ReLU + fc2 (128->10), streaming w1 over K tiles.

    Grid axis 0 walks K in tiles; w1 tiles are double-buffered by BlockSpec so
    the dominant 3.2 MB HBM read is pipelined instead of exposed.
    """
    k = pl.program_id(0)

    @pl.when(k == 0)
    def _():
        acc_ref[...] = jnp.zeros_like(acc_ref)

    acc_ref[...] += jnp.dot(x_ref[...], w1_ref[...],
                            preferred_element_type=jnp.float32)

    @pl.when(k == pl.num_programs(0) - 1)
    def _():
        h = jnp.maximum(acc_ref[...] + b1_ref[...], 0.0)
        out_ref[...] = (jnp.dot(h, w2_ref[...],
                                preferred_element_type=jnp.float32)
                        + b2_ref[...])


# --------------------------- weight packing (once) -------------------------

def pack_params(params):
    """One-time weight repack: done outside the forward so it is not a per-call
    cost (realizes the 'free weight permute' from the review)."""
    w_conv, b_conv, w1, b1, w2, b2 = params

    # Packed conv weight (16, 128): for pool-window position q=(r,s) and output
    # channel c, column 32*q + c holds tap (di,dj) at patch row 4*(r+di)+(s+dj).
    wf = jnp.transpose(w_conv.reshape(32, 3, 3), (1, 2, 0))        # (di, dj, c)
    blocks = []
    for (r, s) in ((0, 0), (0, 1), (1, 0), (1, 1)):
        g = jnp.zeros((4, 4, 32), w_conv.dtype).at[r:r + 3, s:s + 3, :].set(wf)
        blocks.append(g.reshape(16, 32))
    w16 = jnp.concatenate(blocks, axis=1)                          # (16, 128)

    # fc1 weight permuted so its K dim is (ph, pw, c) -- the natural flatten
    # order of the kernel's pooled output.  Kills the activation transpose.
    w1r = (w1.reshape(128, 32, 14, 14)
             .transpose(2, 3, 1, 0)
             .reshape(32 * 14 * 14, 128))                          # (6272, 128)

    return (w16, b_conv.reshape(1, 32), w1r, b1.reshape(1, 128),
            w2.T, b2.reshape(1, 10))


# ------------------------------ JAX forward -------------------------------

def _full_spec(shape):
    # Single-block spec: block == full array (satisfies the (8,128) rule).
    return pl.BlockSpec(shape, lambda i: tuple(0 for _ in shape))


@jax.jit
def cnn_forward(x, packed):
    """x: (N, 1, 28, 28) float32, packed = pack_params(params) -> (N, 10)."""
    w16, b_c, w1r, b1r, w2t, b2r = packed
    N = x.shape[0]
    M = N * 14 * 14
    K = 32 * 14 * 14          # 6272
    KT = 7                    # K tiles
    tk = K // KT              # 896 = 7*128 (lane-aligned)

    # --- glue (fused by XLA under jit): pad + 4x4/stride-2 patch extraction ---
    xp = jnp.pad(x[:, 0], ((0, 0), (1, 1), (1, 1)))                # (N, 30, 30)
    cols = [xp[:, a:a + 28:2, b:b + 28:2]                          # (N, 14, 14)
            for a in range(4) for b in range(4)]
    patches = jnp.stack(cols, axis=-1).reshape(M, 16)              # (M, 16)

    # --- kernel 1: conv + relu + maxpool ---
    pooled = pl.pallas_call(
        conv_relu_pool_kernel,
        grid=(1,),
        in_specs=[_full_spec((M, 16)), _full_spec((16, 128)), _full_spec((1, 32))],
        out_specs=_full_spec((M, 32)),
        out_shape=jax.ShapeDtypeStruct((M, 32), jnp.float32),
        compiler_params=pltpu.CompilerParams(dimension_semantics=("arbitrary",)),
    )(patches, w16, b_c)

    # Contiguous reshape only (no transpose): row-major (n, ph, pw, c) layout
    # matches the permuted w1r, so this is a free bitcast in XLA.
    flat = pooled.reshape(N, K)                                    # (N, 6272)

    # --- kernel 2: fc1 + relu + fc2, streaming w1 over K tiles ---
    # TODO(synk): on v7x the K-stream could additionally be split across the two
    # TensorCores; kept single-core here for portability/simplicity.
    logits = pl.pallas_call(
        mlp_kernel,
        grid=(KT,),
        in_specs=[
            pl.BlockSpec((N, tk), lambda k: (0, k)),     # flat K-tile
            pl.BlockSpec((tk, 128), lambda k: (k, 0)),   # w1 K-tile (streamed)
            pl.BlockSpec((1, 128), lambda k: (0, 0)),    # b1
            pl.BlockSpec((128, 10), lambda k: (0, 0)),   # w2
            pl.BlockSpec((1, 10), lambda k: (0, 0)),     # b2
        ],
        out_specs=pl.BlockSpec((N, 10), lambda k: (0, 0)),
        out_shape=jax.ShapeDtypeStruct((N, 10), jnp.float32),
        scratch_shapes=[pltpu.VMEM((N, 128), jnp.float32)],
        compiler_params=pltpu.CompilerParams(dimension_semantics=("arbitrary",)),
    )(flat, w1r, b1r, w2t, b2r)

    return logits


# ----------------------------- reference (JAX) -----------------------------

def reference_forward(x, params):
    w_conv, b_conv, w1, b1, w2, b2 = params
    conv = jax.lax.conv_general_dilated(
        x, w_conv, window_strides=(1, 1), padding="SAME",
        dimension_numbers=("NCHW", "OIHW", "NCHW"))
    conv = conv + b_conv.reshape(1, -1, 1, 1)
    act = jnp.maximum(conv, 0.0)
    pooled = jax.lax.reduce_window(act, -jnp.inf, jax.lax.max,
                                   (1, 1, 2, 2), (1, 1, 2, 2), "VALID")
    flat = pooled.reshape(x.shape[0], -1)
    h = jnp.maximum(flat @ w1.T + b1, 0.0)
    return h @ w2.T + b2


# --------------------------------- main ------------------------------------

if __name__ == "__main__":
    key = jax.random.PRNGKey(0)
    k_x, k_wc, k_bc, k_w1, k_b1, k_w2, k_b2 = jax.random.split(key, 7)

    N = 2
    x = jax.random.normal(k_x, (N, 1, 28, 28), dtype=jnp.float32)

    # Deterministic synthetic parameters (shapes match nn.Module's __init__).
    w_conv = jax.random.normal(k_wc, (32, 1, 3, 3), dtype=jnp.float32) * 0.2
    b_conv = jax.random.normal(k_bc, (32,), dtype=jnp.float32) * 0.1
    w1 = jax.random.normal(k_w1, (128, 32 * 14 * 14), dtype=jnp.float32) * 0.02
    b1 = jax.random.normal(k_b1, (128,), dtype=jnp.float32) * 0.1
    w2 = jax.random.normal(k_w2, (10, 128), dtype=jnp.float32) * 0.1
    b2 = jax.random.normal(k_b2, (10,), dtype=jnp.float32) * 0.1
    params = (w_conv, b_conv, w1, b1, w2, b2)

    packed = jax.block_until_ready(pack_params(params))   # one-time repack

    out = jax.block_until_ready(cnn_forward(x, packed))
    ref = jax.block_until_ready(reference_forward(x, params))

    assert out.shape == (N, 10) and out.dtype == jnp.float32
    assert jnp.allclose(out, ref, rtol=1e-4, atol=1e-4), (
        f"mismatch: max abs err {jnp.max(jnp.abs(out - ref))}")

    print("KERNEL_OK")
</pallas_src>

<mosaic_0001>
module attributes {stable_mosaic.version = 11 : i64} {
  func.func @conv_relu_pool_kernel(%arg0: i32, %arg1: memref<392x16xf32, #tpu.memory_space<vmem>>, %arg2: memref<16x128xf32, #tpu.memory_space<vmem>>, %arg3: memref<1x32xf32, #tpu.memory_space<vmem>>, %arg4: memref<392x32xf32, #tpu.memory_space<vmem>>) attributes {dimension_semantics = [#tpu.dimension_semantics<arbitrary>], iteration_bounds = array<i64: 1>, scalar_prefetch = 0 : i64, scratch_operands = 0 : i64, tpu.core_type = #tpu.core_type<tc>, window_params = [{pipeline_mode = #tpu.pipeline_mode<synchronous>, transform_indices = @transform_0, window_bounds = array<i64: 392, 16>}, {pipeline_mode = #tpu.pipeline_mode<synchronous>, transform_indices = @transform_1, window_bounds = array<i64: 16, 128>}, {pipeline_mode = #tpu.pipeline_mode<synchronous>, transform_indices = @transform_2, window_bounds = array<i64: 1, 32>}, {pipeline_mode = #tpu.pipeline_mode<synchronous>, transform_indices = @transform_3, window_bounds = array<i64: 392, 32>}]} {
    %c0 = arith.constant 0 : index
    %c0_0 = arith.constant 0 : index
    %0 = vector.load %arg1[%c0, %c0_0] : memref<392x16xf32, #tpu.memory_space<vmem>>, vector<392x16xf32>
    %c0_1 = arith.constant 0 : index
    %c0_2 = arith.constant 0 : index
    %1 = vector.load %arg2[%c0_1, %c0_2] : memref<16x128xf32, #tpu.memory_space<vmem>>, vector<16x128xf32>
    %cst = arith.constant dense<0.000000e+00> : vector<392x128xf32>
    %2 = tpu.matmul %0, %1, %cst {dimension_numbers = #tpu.dot_dimension_numbers<[1], [0], [0], [1], [0, 0, 1, 1], [], []>} : vector<392x16xf32>, vector<16x128xf32>, vector<392x128xf32> -> vector<392x128xf32>
    %3 = vector.extract_strided_slice %2 {offsets = [0, 0], sizes = [392, 32], strides = [1, 1]} : vector<392x128xf32> to vector<392x32xf32>
    %4 = vector.extract_strided_slice %2 {offsets = [0, 32], sizes = [392, 32], strides = [1, 1]} : vector<392x128xf32> to vector<392x32xf32>
    %5 = arith.maximumf %3, %4 : vector<392x32xf32>
    %6 = vector.extract_strided_slice %2 {offsets = [0, 64], sizes = [392, 32], strides = [1, 1]} : vector<392x128xf32> to vector<392x32xf32>
    %7 = vector.extract_strided_slice %2 {offsets = [0, 96], sizes = [392, 32], strides = [1, 1]} : vector<392x128xf32> to vector<392x32xf32>
    %8 = arith.maximumf %6, %7 : vector<392x32xf32>
    %9 = arith.maximumf %5, %8 : vector<392x32xf32>
    %c0_3 = arith.constant 0 : index
    %c0_4 = arith.constant 0 : index
    %10 = vector.load %arg3[%c0_3, %c0_4] : memref<1x32xf32, #tpu.memory_space<vmem>>, vector<1x32xf32>
    %11 = vector.broadcast %10 : vector<1x32xf32> to vector<392x32xf32>
    %12 = arith.addf %9, %11 : vector<392x32xf32>
    %cst_5 = arith.constant 0.000000e+00 : f32
    %13 = vector.broadcast %cst_5 : f32 to vector<392x32xf32>
    %14 = arith.maximumf %12, %13 : vector<392x32xf32>
    %c0_6 = arith.constant 0 : index
    %c0_7 = arith.constant 0 : index
    %15 = vector.load %arg4[%c0_6, %c0_7] : memref<392x32xf32, #tpu.memory_space<vmem>>, vector<392x32xf32>
    tpu.vector_store %arg4[%c0_6, %c0_7], %14 {strides = array<i32>} : memref<392x32xf32, #tpu.memory_space<vmem>>, vector<392x32xf32>,
    return
  }
  func.func @transform_0(%arg0: i32) -> (i32, i32) {
    %c0_i32 = arith.constant 0 : i32
    %c0_i32_0 = arith.constant 0 : i32
    %c0_i32_1 = arith.constant 0 : i32
    return %c0_i32, %c0_i32_0 : i32, i32
  }
  func.func @transform_1(%arg0: i32) -> (i32, i32) {
    %c0_i32 = arith.constant 0 : i32
    %c0_i32_0 = arith.constant 0 : i32
    %c0_i32_1 = arith.constant 0 : i32
    return %c0_i32, %c0_i32_0 : i32, i32
  }
  func.func @transform_2(%arg0: i32) -> (i32, i32) {
    %c0_i32 = arith.constant 0 : i32
    %c0_i32_0 = arith.constant 0 : i32
    %c0_i32_1 = arith.constant 0 : i32
    return %c0_i32, %c0_i32_0 : i32, i32
  }
  func.func @transform_3(%arg0: i32) -> (i32, i32) {
    %c0_i32 = arith.constant 0 : i32
    %c0_i32_0 = arith.constant 0 : i32
    %c0_i32_1 = arith.constant 0 : i32
    return %c0_i32, %c0_i32_0 : i32, i32
  }
}

module attributes {stable_mosaic.version = 11 : i64} {
  func.func @mlp_kernel(%arg0: i32, %arg1: memref<2x896xf32, #tpu.memory_space<vmem>>, %arg2: memref<896x128xf32, #tpu.memory_space<vmem>>, %arg3: memref<1x128xf32, #tpu.memory_space<vmem>>, %arg4: memref<128x10xf32, #tpu.memory_space<vmem>>, %arg5: memref<1x10xf32, #tpu.memory_space<vmem>>, %arg6: memref<2x10xf32, #tpu.memory_space<vmem>>, %arg7: memref<2x128xf32, #tpu.memory_space<vmem>>) attributes {dimension_semantics = [#tpu.dimension_semantics<arbitrary>], iteration_bounds = array<i64: 7>, scalar_prefetch = 0 : i64, scratch_operands = 1 : i64, tpu.core_type = #tpu.core_type<tc>, window_params = [{transform_indices = @transform_0, window_bounds = array<i64: 2, 896>}, {transform_indices = @transform_1, window_bounds = array<i64: 896, 128>}, {pipeline_mode = #tpu.pipeline_mode<synchronous>, transform_indices = @transform_2, window_bounds = array<i64: 1, 128>}, {pipeline_mode = #tpu.pipeline_mode<synchronous>, transform_indices = @transform_3, window_bounds = array<i64: 128, 10>}, {pipeline_mode = #tpu.pipeline_mode<synchronous>, transform_indices = @transform_4, window_bounds = array<i64: 1, 10>}, {pipeline_mode = #tpu.pipeline_mode<synchronous>, transform_indices = @transform_5, window_bounds = array<i64: 2, 10>}]} {
    %c0_i32 = arith.constant 0 : i32
    %0 = arith.cmpi eq, %arg0, %c0_i32 : i32
    %1 = arith.extui %0 : i1 to i32
    %c0_i32_0 = arith.constant 0 : i32
    %2 = arith.cmpi ne, %1, %c0_i32_0 : i32
    scf.if %2 {
      %cst_9 = arith.constant 0.000000e+00 : f32
      %12 = vector.broadcast %cst_9 : f32 to vector<2x128xf32>
      %c0_10 = arith.constant 0 : index
      %c0_11 = arith.constant 0 : index
      %13 = vector.load %arg7[%c0_10, %c0_11] : memref<2x128xf32, #tpu.memory_space<vmem>>, vector<2x128xf32>
      tpu.vector_store %arg7[%c0_10, %c0_11], %12 {strides = array<i32>} : memref<2x128xf32, #tpu.memory_space<vmem>>, vector<2x128xf32>,
    } else {
    }
    %c0 = arith.constant 0 : index
    %c0_1 = arith.constant 0 : index
    %3 = vector.load %arg7[%c0, %c0_1] : memref<2x128xf32, #tpu.memory_space<vmem>>, vector<2x128xf32>
    %c0_2 = arith.constant 0 : index
    %c0_3 = arith.constant 0 : index
    %4 = vector.load %arg1[%c0_2, %c0_3] : memref<2x896xf32, #tpu.memory_space<vmem>>, vector<2x896xf32>
    %c0_4 = arith.constant 0 : index
    %c0_5 = arith.constant 0 : index
    %5 = vector.load %arg2[%c0_4, %c0_5] : memref<896x128xf32, #tpu.memory_space<vmem>>, vector<896x128xf32>
    %cst = arith.constant dense<0.000000e+00> : vector<2x128xf32>
    %6 = tpu.matmul %4, %5, %cst {dimension_numbers = #tpu.dot_dimension_numbers<[1], [0], [0], [1], [0, 0, 1, 1], [], []>} : vector<2x896xf32>, vector<896x128xf32>, vector<2x128xf32> -> vector<2x128xf32>
    %7 = arith.addf %3, %6 : vector<2x128xf32>
    %c0_6 = arith.constant 0 : index
    %c0_7 = arith.constant 0 : index
    %8 = vector.load %arg7[%c0_6, %c0_7] : memref<2x128xf32, #tpu.memory_space<vmem>>, vector<2x128xf32>
    tpu.vector_store %arg7[%c0_6, %c0_7], %7 {strides = array<i32>} : memref<2x128xf32, #tpu.memory_space<vmem>>, vector<2x128xf32>,
    %c6_i32 = arith.constant 6 : i32
    %9 = arith.cmpi eq, %arg0, %c6_i32 : i32
    %10 = arith.extui %9 : i1 to i32
    %c0_i32_8 = arith.constant 0 : i32
    %11 = arith.cmpi ne, %10, %c0_i32_8 : i32
    scf.if %11 {
      %c0_9 = arith.constant 0 : index
      %c0_10 = arith.constant 0 : index
      %12 = vector.load %arg7[%c0_9, %c0_10] : memref<2x128xf32, #tpu.memory_space<vmem>>, vector<2x128xf32>
      %c0_11 = arith.constant 0 : index
      %c0_12 = arith.constant 0 : index
      %13 = vector.load %arg3[%c0_11, %c0_12] : memref<1x128xf32, #tpu.memory_space<vmem>>, vector<1x128xf32>
      %14 = vector.broadcast %13 : vector<1x128xf32> to vector<2x128xf32>
      %15 = arith.addf %12, %14 : vector<2x128xf32>
      %cst_13 = arith.constant 0.000000e+00 : f32
      %16 = vector.broadcast %cst_13 : f32 to vector<2x128xf32>
      %17 = arith.maximumf %15, %16 : vector<2x128xf32>
      %c0_14 = arith.constant 0 : index
      %c0_15 = arith.constant 0 : index
      %18 = vector.load %arg4[%c0_14, %c0_15] : memref<128x10xf32, #tpu.memory_space<vmem>>, vector<128x10xf32>
      %cst_16 = arith.constant dense<0.000000e+00> : vector<2x10xf32>
      %19 = tpu.matmul %17, %18, %cst_16 {dimension_numbers = #tpu.dot_dimension_numbers<[1], [0], [0], [1], [0, 0, 1, 1], [], []>} : vector<2x128xf32>, vector<128x10xf32>, vector<2x10xf32> -> vector<2x10xf32>
      %c0_17 = arith.constant 0 : index
      %c0_18 = arith.constant 0 : index
      %20 = vector.load %arg5[%c0_17, %c0_18] : memref<1x10xf32, #tpu.memory_space<vmem>>, vector<1x10xf32>
      %21 = vector.broadcast %20 : vector<1x10xf32> to vector<2x10xf32>
      %22 = arith.addf %19, %21 : vector<2x10xf32>
      %c0_19 = arith.constant 0 : index
      %c0_20 = arith.constant 0 : index
      %23 = vector.load %arg6[%c0_19, %c0_20] : memref<2x10xf32, #tpu.memory_space<vmem>>, vector<2x10xf32>
      tpu.vector_store %arg6[%c0_19, %c0_20], %22 {strides = array<i32>} : memref<2x10xf32, #tpu.memory_space<vmem>>, vector<2x10xf32>,
    } else {
    }
    return
  }
  func.func @transform_0(%arg0: i32) -> (i32, i32) {
    %c0_i32 = arith.constant 0 : i32
    %c0_i32_0 = arith.constant 0 : i32
    return %c0_i32, %arg0 : i32, i32
  }
  func.func @transform_1(%arg0: i32) -> (i32, i32) {
    %c0_i32 = arith.constant 0 : i32
    %c0_i32_0 = arith.constant 0 : i32
    return %arg0, %c0_i32 : i32, i32
  }
  func.func @transform_2(%arg0: i32) -> (i32, i32) {
    %c0_i32 = arith.constant 0 : i32
    %c0_i32_0 = arith.constant 0 : i32
    %c0_i32_1 = arith.constant 0 : i32
    return %c0_i32, %c0_i32_0 : i32, i32
  }
  func.func @transform_3(%arg0: i32) -> (i32, i32) {
    %c0_i32 = arith.constant 0 : i32
    %c0_i32_0 = arith.constant 0 : i32
    %c0_i32_1 = arith.constant 0 : i32
    return %c0_i32, %c0_i32_0 : i32, i32
  }
  func.func @transform_4(%arg0: i32) -> (i32, i32) {
    %c0_i32 = arith.constant 0 : i32
    %c0_i32_0 = arith.constant 0 : i32
    %c0_i32_1 = arith.constant 0 : i32
    return %c0_i32, %c0_i32_0 : i32, i32
  }
  func.func @transform_5(%arg0: i32) -> (i32, i32) {
    %c0_i32 = arith.constant 0 : i32
    %c0_i32_0 = arith.constant 0 : i32
    %c0_i32_1 = arith.constant 0 : i32
    return %c0_i32, %c0_i32_0 : i32, i32
  }
}

</mosaic_0001>

<llo_original>
// kernel: cnn_forward.3
$region0: #{cnn_forward.3}
  #allocation0 [shape = 'u32[]', space=smem, size = 0x4, offset = 0x4, fixed_abs, tag = 'smem constant byte address 0x4 - core index']
  #allocation1 [shape = 'u32[144,128]{1,0:T(1,128)}', space=vmem, size = 0x12000, scoped, tag = 'internal scratch']
  #allocation2 [shape = 'f32[2,128]{1,0:T(2,128)}', space=vmem, size = 0x400, scoped, tag = 'scratch operand']
  %s0 = inlined_call_operand.vmem [shape: f32[2,6272], index: 0, kind: input, shape index: {}]
  %s1 = inlined_call_operand.hbm [shape: f32[6272,128], index: 1, kind: input, shape index: {}]
  %s2 = inlined_call_operand.hbm [shape: f32[1,128], index: 2, kind: input, shape index: {}]
  %s3 = inlined_call_operand.vmem [shape: f32[128,10], index: 3, kind: input, shape index: {}]
  %s4 = inlined_call_operand.hbm [shape: f32[1,10], index: 4, kind: input, shape index: {}]
  %s5 = inlined_call_operand.hbm [shape: f32[2,10], index: 5, kind: output, shape index: {}]
  %s6 = sld [smem:[#allocation0]]
  $region73: #{cnn_forward.3} parent=0
    _
  %s8 = ssub.s32 1, %s6
  %s9 = scalar_select 0, %s8, %s6
  $region1: #{cnn_forward.3} parent=0
    #allocation3 [shape = 'u8[917504]{0}', space=vmem, size = 0xe0000, scoped, tag = 'input window, operand 1']
    #allocation4 [shape = 's32[2]{0}', space=sflag, size = 0x8, scoped, tag = 'scoped memory for cnn_forward.3']
    #allocation5 [shape = 's32[2]{0}', space=sflag, size = 0x8, scoped, tag = 'scoped memory for cnn_forward.3']
    #allocation6 [shape = 'u8[512]{0}', space=vmem, size = 0x400, scoped, tag = 'input window, operand 2, single buffered']
    #allocation7 [shape = 's32[1]{0}', space=sflag, size = 0x4, scoped, tag = 'scoped memory for cnn_forward.3']
    #allocation8 [shape = 'u8[512]{0}', space=vmem, size = 0x400, scoped, tag = 'input window, operand 4, single buffered']
    #allocation9 [shape = 'u8[1024]{0}', space=vmem, size = 0x400, scoped, tag = 'output window, operand 0, single buffered']
    %10 = vsyncpa [#allocation4], 0
    %s11 = scalar_lea.sflag [#allocation4], 1
    %12 = vsyncpa %s11, 0
    %13 = vsyncpa [#allocation7], 0
    %14 = vsyncpa [#allocation5], 0
    loop: start=0, step=1, limit=9
    $region2: #{cnn_forward.3} parent=1 // loop_pre_header
      _
    $region3: #{cnn_forward.3} parent=1 // loop_header
      %s16 = sphi 0, %s20
      %p17 = scmp.ge.s32.totalorder %s16, 9
      %s26 = sphi 0, %s28
      %s29 = sphi 0, %s26
      %s30 = sphi 0, %s29
      %s46 = sphi 0, %s30
      %s52 = sphi 0, %s54
      %s55 = sphi 0, %s52
      %s56 = sphi 0, %s55
      %s72 = sphi 0, %s56
      %s76 = sphi 0, %s76
      %s78 = sphi 0, %s76
      %s79 = sphi 0, %s78
      %s93 = sphi 0, %s79
      %s97 = sphi 0, %s97
      %s99 = sphi 0, %s97
      %s100 = sphi 0, %s99
      %s114 = sphi 0, %s100
      %s118 = sphi 0, %s118
      %s120 = sphi 0, %s118
      %s121 = sphi 0, %s120
      %s135 = sphi 0, %s121
      %s139 = sphi 0, %s139
      %s141 = sphi 0, %s139
      %s142 = sphi 0, %s141
      %s156 = sphi 0, %s142
    $region4: #{cnn_forward.3} parent=1 // loop_header_branch
      %19 = sbr.rel (%p17) target = $region8
    $region5: #{cnn_forward.3} parent=1 // loop_body
      %s21 = ssub.s32 %s16, 1
      %s22 = ssub.s32 %s16, 2
      %s23 = sadd.s32 %s16, 1
      %s24 = ssub.s32 %s16, %s23
      %p25 = scmp.eq.s32.totalorder %s24, 0
      %s27 = sadd.s32 %s26, 1
      %s28 = scalar_select %p25, %s26, %s27
      %p31 = pneg %p25
      %p32 = scmp.eq.s32.totalorder %s16, 6
      %p33 = por %p31, %p32
      %p34 = scmp.ne.s32.totalorder %s26, %s29
      %p35 = scmp.eq.s32.totalorder %s16, 0
      %p36 = por %p34, %p35
      %p37 = scmp.ne.s32.totalorder %s26, %s29
      %p38 = scmp.eq.s32.totalorder %s21, 6
      %p39 = por %p37, %p38
      %p40 = scmp.ne.s32.totalorder %s29, %s30
      %p41 = scmp.eq.s32.totalorder %s21, 0
      %p42 = por %p40, %p41
      %p43 = scmp.ne.s32.totalorder %s29, %s30
      %p44 = scmp.eq.s32.totalorder %s22, 6
      %p45 = por %p43, %p44
      %p47 = scmp.ne.s32.totalorder %s30, %s46
      %p48 = scmp.eq.s32.totalorder %s22, 0
      %p49 = por %p47, %p48
      %s50 = ssub.s32 %s16, %s23
      %p51 = scmp.eq.s32.totalorder %s50, 0
      %s53 = sadd.s32 %s52, 1
      %s54 = scalar_select %p51, %s52, %s53
      %p57 = pneg %p51
      %p58 = scmp.eq.s32.totalorder %s16, 6
      %p59 = por %p57, %p58
      %p60 = scmp.ne.s32.totalorder %s52, %s55
      %p61 = scmp.eq.s32.totalorder %s16, 0
      %p62 = por %p60, %p61
      %p63 = scmp.ne.s32.totalorder %s52, %s55
      %p64 = scmp.eq.s32.totalorder %s21, 6
      %p65 = por %p63, %p64
      %p66 = scmp.ne.s32.totalorder %s55, %s56
      %p67 = scmp.eq.s32.totalorder %s21, 0
      %p68 = por %p66, %p67
      %p69 = scmp.ne.s32.totalorder %s55, %s56
      %p70 = scmp.eq.s32.totalorder %s22, 6
      %p71 = por %p69, %p70
      %p73 = scmp.ne.s32.totalorder %s56, %s72
      %p74 = scmp.eq.s32.totalorder %s22, 0
      %p75 = por %p73, %p74
      %s77 = sadd.s32 %s76, 1
      %p80 = scmp.eq.s32.totalorder %s16, 6
      %p81 = scmp.ne.s32.totalorder %s76, %s78
      %p82 = scmp.eq.s32.totalorder %s16, 0
      %p83 = por %p81, %p82
      %p84 = scmp.ne.s32.totalorder %s76, %s78
      %p85 = scmp.eq.s32.totalorder %s21, 6
      %p86 = por %p84, %p85
      %p87 = scmp.ne.s32.totalorder %s78, %s79
      %p88 = scmp.eq.s32.totalorder %s21, 0
      %p89 = por %p87, %p88
      %p90 = scmp.ne.s32.totalorder %s78, %s79
      %p91 = scmp.eq.s32.totalorder %s22, 6
      %p92 = por %p90, %p91
      %p94 = scmp.ne.s32.totalorder %s79, %s93
      %p95 = scmp.eq.s32.totalorder %s22, 0
      %p96 = por %p94, %p95
      %s98 = sadd.s32 %s97, 1
      %p101 = scmp.eq.s32.totalorder %s16, 6
      %p102 = scmp.ne.s32.totalorder %s97, %s99
      %p103 = scmp.eq.s32.totalorder %s16, 0
      %p104 = por %p102, %p103
      %p105 = scmp.ne.s32.totalorder %s97, %s99
      %p106 = scmp.eq.s32.totalorder %s21, 6
      %p107 = por %p105, %p106
      %p108 = scmp.ne.s32.totalorder %s99, %s100
      %p109 = scmp.eq.s32.totalorder %s21, 0
      %p110 = por %p108, %p109
      %p111 = scmp.ne.s32.totalorder %s99, %s100
      %p112 = scmp.eq.s32.totalorder %s22, 6
      %p113 = por %p111, %p112
      %p115 = scmp.ne.s32.totalorder %s100, %s114
      %p116 = scmp.eq.s32.totalorder %s22, 0
      %p117 = por %p115, %p116
      %s119 = sadd.s32 %s118, 1
      %p122 = scmp.eq.s32.totalorder %s16, 6
      %p123 = scmp.ne.s32.totalorder %s118, %s120
      %p124 = scmp.eq.s32.totalorder %s16, 0
      %p125 = por %p123, %p124
      %p126 = scmp.ne.s32.totalorder %s118, %s120
      %p127 = scmp.eq.s32.totalorder %s21, 6
      %p128 = por %p126, %p127
      %p129 = scmp.ne.s32.totalorder %s120, %s121
      %p130 = scmp.eq.s32.totalorder %s21, 0
      %p131 = por %p129, %p130
      %p132 = scmp.ne.s32.totalorder %s120, %s121
      %p133 = scmp.eq.s32.totalorder %s22, 6
      %p134 = por %p132, %p133
      %p136 = scmp.ne.s32.totalorder %s121, %s135
      %p137 = scmp.eq.s32.totalorder %s22, 0
      %p138 = por %p136, %p137
      %s140 = sadd.s32 %s139, 1
      %p143 = scmp.eq.s32.totalorder %s16, 6
      %p144 = scmp.ne.s32.totalorder %s139, %s141
      %p145 = scmp.eq.s32.totalorder %s16, 0
      %p146 = por %p144, %p145
      %p147 = scmp.ne.s32.totalorder %s139, %s141
      %p148 = scmp.eq.s32.totalorder %s21, 6
      %p149 = por %p147, %p148
      %p150 = scmp.ne.s32.totalorder %s141, %s142
      %p151 = scmp.eq.s32.totalorder %s21, 0
      %p152 = por %p150, %p151
      %p153 = scmp.ne.s32.totalorder %s141, %s142
      %p154 = scmp.eq.s32.totalorder %s22, 6
      %p155 = por %p153, %p154
      %p157 = scmp.ne.s32.totalorder %s142, %s156
      %p158 = scmp.eq.s32.totalorder %s22, 0
      %p159 = por %p157, %p158
      %p160 = scmp.le.s32.totalorder 1, %s16
      %p161 = scmp.lt.s32.totalorder %s16, 8
      %p162 = pnand %p160, %p161
      %p163 = pneg %p162
      // Predicated region
      $region9: #{cnn_forward.3} parent=5 // pred_check
        _
      $region10: #{cnn_forward.3} parent=5 // pred_check_branch
        %165 = sbr.rel (%p162) target = $region12
      $region11: #{cnn_forward.3} parent=5 // pred_region
        %s166 = ssub.s32 %s16, 1
        // Predicated region
        $region13: #{cnn_forward.3} parent=11 // pred_check
          %p167 = pneg %p89
        $region14: #{cnn_forward.3} parent=11 // pred_check_branch
          %169 = sbr.rel (%p167) target = $region16
        $region15: #{cnn_forward.3} parent=11 // pred_region
          %s171 = ssub.s32 16, 16
          %172 = vsyncadd [#allocation7], %s171
          %s174 = sshll.u32 [#allocation6], 4
          %s175 = int_to_ptr.vmem [resolvable:$true] %s174
          %177 = dma.hbm_to_vmem [thread:$0]  %s2, 16, %s175, [#allocation7]
        $region16: #{cnn_forward.3} parent=11 // pred_fallthru
          _
        // Predicated region
        $region17: #{cnn_forward.3} parent=11 // pred_check
          %p178 = pneg %p110
        $region18: #{cnn_forward.3} parent=11 // pred_check_branch
          %180 = sbr.rel (%p178) target = $region20
        $region19: #{cnn_forward.3} parent=11 // pred_region
          _
        $region20: #{cnn_forward.3} parent=11 // pred_fallthru
          _
        // Predicated region
        $region21: #{cnn_forward.3} parent=11 // pred_check
          %p181 = pneg %p131
        $region22: #{cnn_forward.3} parent=11 // pred_check_branch
          %183 = sbr.rel (%p181) target = $region24
        $region23: #{cnn_forward.3} parent=11 // pred_region
          %s185 = ssub.s32 16, 16
          %186 = vsyncadd [#allocation7], %s185
          %s188 = sshll.u32 [#allocation8], 4
          %s189 = int_to_ptr.vmem [resolvable:$true] %s188
          %191 = dma.hbm_to_vmem [thread:$0]  %s4, 16, %s189, [#allocation7]
        $region24: #{cnn_forward.3} parent=11 // pred_fallthru
          _
      $region12: #{cnn_forward.3} parent=5 // pred_fallthru
        _
      %p192 = scmp.lt.s32.totalorder %s16, 7
      // Predicated region
      $region25: #{cnn_forward.3} parent=5 // pred_check
        %p193 = pneg %p192
      $region26: #{cnn_forward.3} parent=5 // pred_check_branch
        %195 = sbr.rel (%p193) target = $region28
      $region27: #{cnn_forward.3} parent=5 // pred_region
        // Predicated region
        $region29: #{cnn_forward.3} parent=27 // pred_check
          %p196 = pneg %p36
        $region30: #{cnn_forward.3} parent=27 // pred_check_branch
          %198 = sbr.rel (%p196) target = $region32
        $region31: #{cnn_forward.3} parent=27 // pred_region
          %s199 = smul.u32 7, %s16
          %p200 = scmp.lt.s32.totalorder %s199, 48
          %s201 = scalar_select %p200, %s199, 48
          %s202 = smul.addr %s201, 2
          %s203 = scalar_lea.vmem %s0, %s202
          %s204 = smul.u32 7, %s16
        $region32: #{cnn_forward.3} parent=27 // pred_fallthru
          _
        // Predicated region
        $region33: #{cnn_forward.3} parent=27 // pred_check
          %p205 = pneg %p62
        $region34: #{cnn_forward.3} parent=27 // pred_check_branch
          %207 = sbr.rel (%p205) target = $region36
        $region35: #{cnn_forward.3} parent=27 // pred_region
          %s208 = sand.u32 %s52, 1
          %s209 = scalar_lea.sflag [#allocation4], %s208
          %s210 = sand.u32 %s52, 1
          %s211 = smul.addr %s210, 896
          %s212 = scalar_lea.vmem [#allocation3], %s211
          %s213 = smul.u32 112, %s16
          %s215 = ssub.s32 14336, 14336
          %216 = vsyncadd %s209, %s215
          %s217 = smul.addr %s213, 128
          %s218 = scalar_lea.hbm %s1, %s217
          %s219 = sshll.u32 %s212, 4
          %s220 = int_to_ptr.vmem [resolvable:$true] %s219
          %225 = dma.hbm_to_vmem [thread:$0]  %s218, 14336, %s220, %s209, 128, 128, 8
        $region36: #{cnn_forward.3} parent=27 // pred_fallthru
          _
      $region28: #{cnn_forward.3} parent=5 // pred_fallthru
        _
      %p226 = scmp.le.s32.totalorder 1, %s16
      %p227 = scmp.lt.s32.totalorder %s16, 8
      %p228 = pnand %p226, %p227
      %p229 = pneg %p228
      // Predicated region
      $region37: #{cnn_forward.3} parent=5 // pred_check
        _
      $region38: #{cnn_forward.3} parent=5 // pred_check_branch
        %231 = sbr.rel (%p228) target = $region40
      $region39: #{cnn_forward.3} parent=5 // pred_region
        %s232 = ssub.s32 %s16, 1
        %s233 = sand.u32 %s55, 1
        %s234 = scalar_lea.sflag [#allocation4], %s233
        %s235 = sand.u32 %s55, 1
        %s236 = smul.addr %s235, 896
        %s237 = scalar_lea.vmem [#allocation3], %s236
        // Predicated region
        $region41: #{cnn_forward.3} parent=39 // pred_check
          %p238 = pneg %p68
        $region42: #{cnn_forward.3} parent=39 // pred_check_branch
          %240 = sbr.rel (%p238) target = $region44
        $region43: #{cnn_forward.3} parent=39 // pred_region
          %241 = dma.done %s234, 14336
        $region44: #{cnn_forward.3} parent=39 // pred_fallthru
          _
        // Predicated region
        $region45: #{cnn_forward.3} parent=39 // pred_check
          %p242 = pneg %p89
        $region46: #{cnn_forward.3} parent=39 // pred_check_branch
          %244 = sbr.rel (%p242) target = $region48
        $region47: #{cnn_forward.3} parent=39 // pred_region
          %245 = dma.done [#allocation7], 16
        $region48: #{cnn_forward.3} parent=39 // pred_fallthru
          _
        // Predicated region
        $region49: #{cnn_forward.3} parent=39 // pred_check
          %p246 = pneg %p131
        $region50: #{cnn_forward.3} parent=39 // pred_check_branch
          %248 = sbr.rel (%p246) target = $region52
        $region51: #{cnn_forward.3} parent=39 // pred_region
          %249 = dma.done [#allocation7], 16
        $region52: #{cnn_forward.3} parent=39 // pred_fallthru
          _
        %s250 = smul.u32 7, %s21
        %p251 = scmp.lt.s32.totalorder %s250, 48
        %s252 = scalar_select %p251, %s250, 48
        %s253 = smul.addr %s252, 2
        %s254 = scalar_lea.vmem %s0, %s253
        %p255 = pneg %p42
        %p256 = pneg %p39
        %s257 = sand.u32 %s55, 1
        %s258 = scalar_lea.sflag [#allocation4], %s257
        %s259 = sand.u32 %s55, 1
        %s260 = smul.addr %s259, 896
        %s261 = scalar_lea.vmem [#allocation3], %s260
        %p262 = pneg %p68
        %p263 = pneg %p65
        %p264 = pneg %p89
        %p265 = pneg %p86
        %p266 = pneg %p110
        %p267 = pneg %p107
        %p268 = pneg %p131
        %p269 = pneg %p128
        %p270 = pneg %p152
        %p271 = pneg %p149
        %s272 = smul.u32 7, %s21
        %p273 = scmp.lt.s32.totalorder %s272, 48
        %s274 = scalar_select %p273, %s272, 48
        %s275 = smul.addr %s274, 2
        %s276 = scalar_lea.vmem %s0, %s275
        %s277 = smul.u32 7, %s21
        %s278 = smul.u32 112, %s21
        %p279 = scmp.eq.s32.totalorder %s21, 0
        // Predicated region
        $region53: #{cnn_forward.3} parent=39 // pred_check
          %p280 = pneg %p279
        $region54: #{cnn_forward.3} parent=39 // pred_check_branch
          %282 = sbr.rel (%p280) target = $region56
        $region55: #{cnn_forward.3} parent=39 // pred_region
          %283 = vst [vmem:[#allocation2] sm:$0x3] 0.0
        $region56: #{cnn_forward.3} parent=39 // pred_fallthru
          _
        %v284 = vld [vmem:[#allocation2] sm:$0x3]
        %v285 = vld [vmem:[%s276] sm:$0xff]
        %v286 = vld [vmem:[%s276 + $0x8] sm:$0x3f]
        %v287 = vld [vmem:[%s237] sm:$0xff]
        %v288 = vld [vmem:[%s237 + $0x8] sm:$0xff]
        %v289 = vld [vmem:[%s237 + $0x10] sm:$0xff]
        %v290 = vld [vmem:[%s237 + $0x18] sm:$0xff]
        %v291 = vld [vmem:[%s237 + $0x20] sm:$0xff]
        %v292 = vld [vmem:[%s237 + $0x28] sm:$0xff]
        %v293 = vld [vmem:[%s237 + $0x30] sm:$0xff]
        %v294 = vld [vmem:[%s237 + $0x38] sm:$0xff]
        %v295 = vld [vmem:[%s237 + $0x40] sm:$0xff]
        %v296 = vld [vmem:[%s237 + $0x48] sm:$0xff]
        %v297 = vld [vmem:[%s237 + $0x50] sm:$0xff]
        %v298 = vld [vmem:[%s237 + $0x58] sm:$0xff]
        %v299 = vld [vmem:[%s237 + $0x60] sm:$0xff]
        %v300 = vld [vmem:[%s237 + $0x68] sm:$0xff]
        %v301 = vld [vmem:[%s237 + $0x70] sm:$0xff]
        %v302 = vld [vmem:[%s237 + $0x78] sm:$0xff]
        %v303 = vld [vmem:[%s237 + $0x80] sm:$0xff]
        %v304 = vld [vmem:[%s237 + $0x88] sm:$0xff]
        %v305 = vld [vmem:[%s237 + $0x90] sm:$0xff]
        %v306 = vld [vmem:[%s237 + $0x98] sm:$0xff]
        %v307 = vld [vmem:[%s237 + $0xa0] sm:$0xff]
        %v308 = vld [vmem:[%s237 + $0xa8] sm:$0xff]
        %v309 = vld [vmem:[%s237 + $0xb0] sm:$0xff]
        %v310 = vld [vmem:[%s237 + $0xb8] sm:$0xff]
        %v311 = vld [vmem:[%s237 + $0xc0] sm:$0xff]
        %v312 = vld [vmem:[%s237 + $0xc8] sm:$0xff]
        %v313 = vld [vmem:[%s237 + $0xd0] sm:$0xff]
        %v314 = vld [vmem:[%s237 + $0xd8] sm:$0xff]
        %v315 = vld [vmem:[%s237 + $0xe0] sm:$0xff]
        %v316 = vld [vmem:[%s237 + $0xe8] sm:$0xff]
        %v317 = vld [vmem:[%s237 + $0xf0] sm:$0xff]
        %v318 = vld [vmem:[%s237 + $0xf8] sm:$0xff]
        %v319 = vld [vmem:[%s237 + $0x100] sm:$0xff]
        %v320 = vld [vmem:[%s237 + $0x108] sm:$0xff]
        %v321 = vld [vmem:[%s237 + $0x110] sm:$0xff]
        %v322 = vld [vmem:[%s237 + $0x118] sm:$0xff]
        %v323 = vld [vmem:[%s237 + $0x120] sm:$0xff]
        %v324 = vld [vmem:[%s237 + $0x128] sm:$0xff]
        %v325 = vld [vmem:[%s237 + $0x130] sm:$0xff]
        %v326 = vld [vmem:[%s237 + $0x138] sm:$0xff]
        %v327 = vld [vmem:[%s237 + $0x140] sm:$0xff]
        %v328 = vld [vmem:[%s237 + $0x148] sm:$0xff]
        %v329 = vld [vmem:[%s237 + $0x150] sm:$0xff]
        %v330 = vld [vmem:[%s237 + $0x158] sm:$0xff]
        %v331 = vld [vmem:[%s237 + $0x160] sm:$0xff]
        %v332 = vld [vmem:[%s237 + $0x168] sm:$0xff]
        %v333 = vld [vmem:[%s237 + $0x170] sm:$0xff]
        %v334 = vld [vmem:[%s237 + $0x178] sm:$0xff]
        %v335 = vld [vmem:[%s237 + $0x180] sm:$0xff]
        %v336 = vld [vmem:[%s237 + $0x188] sm:$0xff]
        %v337 = vld [vmem:[%s237 + $0x190] sm:$0xff]
        %v338 = vld [vmem:[%s237 + $0x198] sm:$0xff]
        %v339 = vld [vmem:[%s237 + $0x1a0] sm:$0xff]
        %v340 = vld [vmem:[%s237 + $0x1a8] sm:$0xff]
        %v341 = vld [vmem:[%s237 + $0x1b0] sm:$0xff]
        %v342 = vld [vmem:[%s237 + $0x1b8] sm:$0xff]
        %v343 = vld [vmem:[%s237 + $0x1c0] sm:$0xff]
        %v344 = vld [vmem:[%s237 + $0x1c8] sm:$0xff]
        %v345 = vld [vmem:[%s237 + $0x1d0] sm:$0xff]
        %v346 = vld [vmem:[%s237 + $0x1d8] sm:$0xff]
        %v347 = vld [vmem:[%s237 + $0x1e0] sm:$0xff]
        %v348 = vld [vmem:[%s237 + $0x1e8] sm:$0xff]
        %v349 = vld [vmem:[%s237 + $0x1f0] sm:$0xff]
        %v350 = vld [vmem:[%s237 + $0x1f8] sm:$0xff]
        %v351 = vld [vmem:[%s237 + $0x200] sm:$0xff]
        %v352 = vld [vmem:[%s237 + $0x208] sm:$0xff]
        %v353 = vld [vmem:[%s237 + $0x210] sm:$0xff]
        %v354 = vld [vmem:[%s237 + $0x218] sm:$0xff]
        %v355 = vld [vmem:[%s237 + $0x220] sm:$0xff]
        %v356 = vld [vmem:[%s237 + $0x228] sm:$0xff]
        %v357 = vld [vmem:[%s237 + $0x230] sm:$0xff]
        %v358 = vld [vmem:[%s237 + $0x238] sm:$0xff]
        %v359 = vld [vmem:[%s237 + $0x240] sm:$0xff]
        %v360 = vld [vmem:[%s237 + $0x248] sm:$0xff]
        %v361 = vld [vmem:[%s237 + $0x250] sm:$0xff]
        %v362 = vld [vmem:[%s237 + $0x258] sm:$0xff]
        %v363 = vld [vmem:[%s237 + $0x260] sm:$0xff]
        %v364 = vld [vmem:[%s237 + $0x268] sm:$0xff]
        %v365 = vld [vmem:[%s237 + $0x270] sm:$0xff]
        %v366 = vld [vmem:[%s237 + $0x278] sm:$0xff]
        %v367 = vld [vmem:[%s237 + $0x280] sm:$0xff]
        %v368 = vld [vmem:[%s237 + $0x288] sm:$0xff]
        %v369 = vld [vmem:[%s237 + $0x290] sm:$0xff]
        %v370 = vld [vmem:[%s237 + $0x298] sm:$0xff]
        %v371 = vld [vmem:[%s237 + $0x2a0] sm:$0xff]
        %v372 = vld [vmem:[%s237 + $0x2a8] sm:$0xff]
        %v373 = vld [vmem:[%s237 + $0x2b0] sm:$0xff]
        %v374 = vld [vmem:[%s237 + $0x2b8] sm:$0xff]
        %v375 = vld [vmem:[%s237 + $0x2c0] sm:$0xff]
        %v376 = vld [vmem:[%s237 + $0x2c8] sm:$0xff]
        %v377 = vld [vmem:[%s237 + $0x2d0] sm:$0xff]
        %v378 = vld [vmem:[%s237 + $0x2d8] sm:$0xff]
        %v379 = vld [vmem:[%s237 + $0x2e0] sm:$0xff]
        %v380 = vld [vmem:[%s237 + $0x2e8] sm:$0xff]
        %v381 = vld [vmem:[%s237 + $0x2f0] sm:$0xff]
        %v382 = vld [vmem:[%s237 + $0x2f8] sm:$0xff]
        %v383 = vld [vmem:[%s237 + $0x300] sm:$0xff]
        %v384 = vld [vmem:[%s237 + $0x308] sm:$0xff]
        %v385 = vld [vmem:[%s237 + $0x310] sm:$0xff]
        %v386 = vld [vmem:[%s237 + $0x318] sm:$0xff]
        %v387 = vld [vmem:[%s237 + $0x320] sm:$0xff]
        %v388 = vld [vmem:[%s237 + $0x328] sm:$0xff]
        %v389 = vld [vmem:[%s237 + $0x330] sm:$0xff]
        %v390 = vld [vmem:[%s237 + $0x338] sm:$0xff]
        %v391 = vld [vmem:[%s237 + $0x340] sm:$0xff]
        %v392 = vld [vmem:[%s237 + $0x348] sm:$0xff]
        %v393 = vld [vmem:[%s237 + $0x350] sm:$0xff]
        %v394 = vld [vmem:[%s237 + $0x358] sm:$0xff]
        %v395 = vld [vmem:[%s237 + $0x360] sm:$0xff]
        %v396 = vld [vmem:[%s237 + $0x368] sm:$0xff]
        %v397 = vld [vmem:[%s237 + $0x370] sm:$0xff]
        %v398 = vld [vmem:[%s237 + $0x378] sm:$0xff]
        %v401 = vcombine.high %v285, %v285
        %v403 = vunpack.c.l.s4 1983009808
        %v404 = vunpack.c.0.s8 %v403
        %v405 = vlaneseq
        %v406 = vshrl.u32 %v405, 7
        %v407 = vsub.s32 %v404, %v406
        %v408 = vrot.slane %v285, %v407
        %v410 = vunpack.c.l.s4 1983009808
        %v411 = vunpack.c.0.s8 %v410
        %v412 = vlaneseq
        %v413 = vshrl.u32 %v412, 7
        %v414 = vsub.s32 %v411, %v413
        %v415 = vrot.slane %v401, %v414
        %v416 = vcombine.high %v408, %v408
        %v417 = vcombine.high %v415, %v415
        %v418 = vcombine.high %v286, %v286
        %v420 = vunpack.c.l.s4 1983009808
        %v421 = vunpack.c.0.s8 %v420
        %v422 = vlaneseq
        %v423 = vshrl.u32 %v422, 7
        %v424 = vsub.s32 %v421, %v423
        %v425 = vrot.slane %v286, %v424
        %v427 = vunpack.c.l.s4 1983009808
        %v428 = vunpack.c.0.s8 %v427
        %v429 = vlaneseq
        %v430 = vshrl.u32 %v429, 7
        %v431 = vsub.s32 %v428, %v430
        %v432 = vrot.slane %v418, %v431
        %v433 = vcombine.high %v425, %v425
        %441 = vmatprep.subr.mxu0 0.0
        %442 = vmatpush1.msra.mxu0 %v302
        %443 = vmatprep.subr.mxu0 0.0
        %444 = vmatpush1.msra.mxu0 %v301
        %445 = vmatprep.subr.mxu0 0.0
        %446 = vmatpush1.msra.mxu0 %v300
        %447 = vmatprep.subr.mxu0 0.0
        %448 = vmatpush1.msra.mxu0 %v299
        %449 = vmatprep.subr.mxu0 0.0
        %450 = vmatpush1.msra.mxu0 %v298
        %451 = vmatprep.subr.mxu0 0.0
        %452 = vmatpush1.msra.mxu0 %v297
        %453 = vmatprep.subr.mxu0 0.0
        %454 = vmatpush1.msra.mxu0 %v296
        %455 = vmatprep.subr.mxu0 0.0
        %456 = vmatpush1.msra.mxu0 %v295
        %457 = vmatprep.subr.mxu0 0.0
        %458 = vmatpush1.msra.mxu0 %v294
        %459 = vmatprep.subr.mxu0 0.0
        %460 = vmatpush1.msra.mxu0 %v293
        %461 = vmatprep.subr.mxu0 0.0
        %462 = vmatpush1.msra.mxu0 %v292
        %463 = vmatprep.subr.mxu0 0.0
        %464 = vmatpush1.msra.mxu0 %v291
        %465 = vmatprep.subr.mxu0 0.0
        %466 = vmatpush1.msra.mxu0 %v290
        %467 = vmatprep.subr.mxu0 0.0
        %468 = vmatpush1.msra.mxu0 %v289
        %469 = vmatprep.subr.mxu0 0.0
        %470 = vmatpush1.msra.mxu0 %v288
        %471 = vmatprep.subr.mxu0 0.0
        %472 = vmatpush1.msra.mxu0 %v287
        %473 = vmatprep.subr.mxu0 0.0
        %474 = vmatpush2.msra.mxu0 %v318
        %475 = vmatprep.subr.mxu0 0.0
        %476 = vmatpush2.msra.mxu0 %v317
        %477 = vmatprep.subr.mxu0 0.0
        %478 = vmatpush2.msra.mxu0 %v316
        %479 = vmatprep.subr.mxu0 0.0
        %480 = vmatpush2.msra.mxu0 %v315
        %481 = vmatprep.subr.mxu0 0.0
        %482 = vmatpush2.msra.mxu0 %v314
        %483 = vmatprep.subr.mxu0 0.0
        %484 = vmatpush2.msra.mxu0 %v313
        %485 = vmatprep.subr.mxu0 0.0
        %486 = vmatpush2.msra.mxu0 %v312
        %487 = vmatprep.subr.mxu0 0.0
        %488 = vmatpush2.msra.mxu0 %v311
        %489 = vmatprep.subr.mxu0 0.0
        %490 = vmatpush2.msra.mxu0 %v310
        %491 = vmatprep.subr.mxu0 0.0
        %492 = vmatpush2.msra.mxu0 %v309
        %493 = vmatprep.subr.mxu0 0.0
        %494 = vmatpush2.msra.mxu0 %v308
        %495 = vmatprep.subr.mxu0 0.0
        %496 = vmatpush2.msra.mxu0 %v307
        %497 = vmatprep.subr.mxu0 0.0
        %498 = vmatpush2.msra.mxu0 %v306
        %499 = vmatprep.subr.mxu0 0.0
        %500 = vmatpush2.msra.mxu0 %v305
        %501 = vmatprep.subr.mxu0 0.0
        %502 = vmatpush2.msra.mxu0 %v304
        %503 = vmatprep.subr.mxu0 0.0
        %504 = vmatpush2.msra.mxu0 %v303
        %505 = vmatprep.mubr.f32.mxu0 %v416
        %506 = vmatmul.mubr.f32.gmra.mxu0 %v408
        %v507 = vpop.f32.mrf.mxu0
        %v508 = vadd.f32 0.0, %v507
        %v509 = vpop.f32.mrf.mxu0
        %510 = vdwg.mxu0
        %511 = vmatprep.subr.mxu0 0.0
        %512 = vmatpush1.msra.mxu0 %v334
        %513 = vmatprep.subr.mxu0 0.0
        %514 = vmatpush1.msra.mxu0 %v333
        %515 = vmatprep.subr.mxu0 0.0
        %516 = vmatpush1.msra.mxu0 %v332
        %517 = vmatprep.subr.mxu0 0.0
        %518 = vmatpush1.msra.mxu0 %v331
        %519 = vmatprep.subr.mxu0 0.0
        %520 = vmatpush1.msra.mxu0 %v330
        %521 = vmatprep.subr.mxu0 0.0
        %522 = vmatpush1.msra.mxu0 %v329
        %523 = vmatprep.subr.mxu0 0.0
        %524 = vmatpush1.msra.mxu0 %v328
        %525 = vmatprep.subr.mxu0 0.0
        %526 = vmatpush1.msra.mxu0 %v327
        %527 = vmatprep.subr.mxu0 0.0
        %528 = vmatpush1.msra.mxu0 %v326
        %529 = vmatprep.subr.mxu0 0.0
        %530 = vmatpush1.msra.mxu0 %v325
        %531 = vmatprep.subr.mxu0 0.0
        %532 = vmatpush1.msra.mxu0 %v324
        %533 = vmatprep.subr.mxu0 0.0
        %534 = vmatpush1.msra.mxu0 %v323
        %535 = vmatprep.subr.mxu0 0.0
        %536 = vmatpush1.msra.mxu0 %v322
        %537 = vmatprep.subr.mxu0 0.0
        %538 = vmatpush1.msra.mxu0 %v321
        %539 = vmatprep.subr.mxu0 0.0
        %540 = vmatpush1.msra.mxu0 %v320
        %541 = vmatprep.subr.mxu0 0.0
        %542 = vmatpush1.msra.mxu0 %v319
        %543 = vmatprep.subr.mxu0 0.0
        %544 = vmatpush2.msra.mxu0 %v350
        %545 = vmatprep.subr.mxu0 0.0
        %546 = vmatpush2.msra.mxu0 %v349
        %547 = vmatprep.subr.mxu0 0.0
        %548 = vmatpush2.msra.mxu0 %v348
        %549 = vmatprep.subr.mxu0 0.0
        %550 = vmatpush2.msra.mxu0 %v347
        %551 = vmatprep.subr.mxu0 0.0
        %552 = vmatpush2.msra.mxu0 %v346
        %553 = vmatprep.subr.mxu0 0.0
        %554 = vmatpush2.msra.mxu0 %v345
        %555 = vmatprep.subr.mxu0 0.0
        %556 = vmatpush2.msra.mxu0 %v344
        %557 = vmatprep.subr.mxu0 0.0
        %558 = vmatpush2.msra.mxu0 %v343
        %559 = vmatprep.subr.mxu0 0.0
        %560 = vmatpush2.msra.mxu0 %v342
        %561 = vmatprep.subr.mxu0 0.0
        %562 = vmatpush2.msra.mxu0 %v341
        %563 = vmatprep.subr.mxu0 0.0
        %564 = vmatpush2.msra.mxu0 %v340
        %565 = vmatprep.subr.mxu0 0.0
        %566 = vmatpush2.msra.mxu0 %v339
        %567 = vmatprep.subr.mxu0 0.0
        %568 = vmatpush2.msra.mxu0 %v338
        %569 = vmatprep.subr.mxu0 0.0
        %570 = vmatpush2.msra.mxu0 %v337
        %571 = vmatprep.subr.mxu0 0.0
        %572 = vmatpush2.msra.mxu0 %v336
        %573 = vmatprep.subr.mxu0 0.0
        %574 = vmatpush2.msra.mxu0 %v335
        %575 = vmatprep.mubr.f32.mxu0 %v417
        %576 = vmatmul.mubr.f32.gmra.mxu0 %v415
        %v577 = vpop.f32.mrf.mxu0
        %v578 = vadd.f32 %v508, %v577
        %v579 = vpop.f32.mrf.mxu0
        %580 = vdwg.mxu0
        %581 = vmatprep.subr.mxu0 0.0
        %582 = vmatpush1.msra.mxu0 %v366
        %583 = vmatprep.subr.mxu0 0.0
        %584 = vmatpush1.msra.mxu0 %v365
        %585 = vmatprep.subr.mxu0 0.0
        %586 = vmatpush1.msra.mxu0 %v364
        %587 = vmatprep.subr.mxu0 0.0
        %588 = vmatpush1.msra.mxu0 %v363
        %589 = vmatprep.subr.mxu0 0.0
        %590 = vmatpush1.msra.mxu0 %v362
        %591 = vmatprep.subr.mxu0 0.0
        %592 = vmatpush1.msra.mxu0 %v361
        %593 = vmatprep.subr.mxu0 0.0
        %594 = vmatpush1.msra.mxu0 %v360
        %595 = vmatprep.subr.mxu0 0.0
        %596 = vmatpush1.msra.mxu0 %v359
        %597 = vmatprep.subr.mxu0 0.0
        %598 = vmatpush1.msra.mxu0 %v358
        %599 = vmatprep.subr.mxu0 0.0
        %600 = vmatpush1.msra.mxu0 %v357
        %601 = vmatprep.subr.mxu0 0.0
        %602 = vmatpush1.msra.mxu0 %v356
        %603 = vmatprep.subr.mxu0 0.0
        %604 = vmatpush1.msra.mxu0 %v355
        %605 = vmatprep.subr.mxu0 0.0
        %606 = vmatpush1.msra.mxu0 %v354
        %607 = vmatprep.subr.mxu0 0.0
        %608 = vmatpush1.msra.mxu0 %v353
        %609 = vmatprep.subr.mxu0 0.0
        %610 = vmatpush1.msra.mxu0 %v352
        %611 = vmatprep.subr.mxu0 0.0
        %612 = vmatpush1.msra.mxu0 %v351
        %613 = vmatprep.subr.mxu0 0.0
        %614 = vmatpush2.msra.mxu0 %v382
        %615 = vmatprep.subr.mxu0 0.0
        %616 = vmatpush2.msra.mxu0 %v381
        %617 = vmatprep.subr.mxu0 0.0
        %618 = vmatpush2.msra.mxu0 %v380
        %619 = vmatprep.subr.mxu0 0.0
        %620 = vmatpush2.msra.mxu0 %v379
        %621 = vmatprep.subr.mxu0 0.0
        %622 = vmatpush2.msra.mxu0 %v378
        %623 = vmatprep.subr.mxu0 0.0
        %624 = vmatpush2.msra.mxu0 %v377
        %625 = vmatprep.subr.mxu0 0.0
        %626 = vmatpush2.msra.mxu0 %v376
        %627 = vmatprep.subr.mxu0 0.0
        %628 = vmatpush2.msra.mxu0 %v375
        %629 = vmatprep.subr.mxu0 0.0
        %630 = vmatpush2.msra.mxu0 %v374
        %631 = vmatprep.subr.mxu0 0.0
        %632 = vmatpush2.msra.mxu0 %v373
        %633 = vmatprep.subr.mxu0 0.0
        %634 = vmatpush2.msra.mxu0 %v372
        %635 = vmatprep.subr.mxu0 0.0
        %636 = vmatpush2.msra.mxu0 %v371
        %637 = vmatprep.subr.mxu0 0.0
        %638 = vmatpush2.msra.mxu0 %v370
        %639 = vmatprep.subr.mxu0 0.0
        %640 = vmatpush2.msra.mxu0 %v369
        %641 = vmatprep.subr.mxu0 0.0
        %642 = vmatpush2.msra.mxu0 %v368
        %643 = vmatprep.subr.mxu0 0.0
        %644 = vmatpush2.msra.mxu0 %v367
        %645 = vmatprep.mubr.f32.mxu0 %v433
        %646 = vmatmul.mubr.f32.gmra.mxu0 %v425
        %v647 = vpop.f32.mrf.mxu0
        %v648 = vadd.f32 %v578, %v647
        %v649 = vpop.f32.mrf.mxu0
        %650 = vdwg.mxu0
        %651 = vmatprep.subr.mxu0 0.0
        %652 = vmatpush1.msra.mxu0 %v398
        %653 = vmatprep.subr.mxu0 0.0
        %654 = vmatpush1.msra.mxu0 %v397
        %655 = vmatprep.subr.mxu0 0.0
        %656 = vmatpush1.msra.mxu0 %v396
        %657 = vmatprep.subr.mxu0 0.0
        %658 = vmatpush1.msra.mxu0 %v395
        %659 = vmatprep.subr.mxu0 0.0
        %660 = vmatpush1.msra.mxu0 %v394
        %661 = vmatprep.subr.mxu0 0.0
        %662 = vmatpush1.msra.mxu0 %v393
        %663 = vmatprep.subr.mxu0 0.0
        %664 = vmatpush1.msra.mxu0 %v392
        %665 = vmatprep.subr.mxu0 0.0
        %666 = vmatpush1.msra.mxu0 %v391
        %667 = vmatprep.subr.mxu0 0.0
        %668 = vmatpush1.msra.mxu0 %v390
        %669 = vmatprep.subr.mxu0 0.0
        %670 = vmatpush1.msra.mxu0 %v389
        %671 = vmatprep.subr.mxu0 0.0
        %672 = vmatpush1.msra.mxu0 %v388
        %673 = vmatprep.subr.mxu0 0.0
        %674 = vmatpush1.msra.mxu0 %v387
        %675 = vmatprep.subr.mxu0 0.0
        %676 = vmatpush1.msra.mxu0 %v386
        %677 = vmatprep.subr.mxu0 0.0
        %678 = vmatpush1.msra.mxu0 %v385
        %679 = vmatprep.subr.mxu0 0.0
        %680 = vmatpush1.msra.mxu0 %v384
        %681 = vmatprep.subr.mxu0 0.0
        %682 = vmatpush1.msra.mxu0 %v383
        %683 = vmatprep.subr.mxu0 0.0
        %684 = vmatpush2.msra.mxu0 0.0
        %685 = vmatprep.subr.mxu0 0.0
        %686 = vmatpush2.msra.mxu0 0.0
        %687 = vmatprep.subr.mxu0 0.0
        %688 = vmatpush2.msra.mxu0 0.0
        %689 = vmatprep.subr.mxu0 0.0
        %690 = vmatpush2.msra.mxu0 0.0
        %691 = vmatprep.subr.mxu0 0.0
        %692 = vmatpush2.msra.mxu0 0.0
        %693 = vmatprep.subr.mxu0 0.0
        %694 = vmatpush2.msra.mxu0 0.0
        %695 = vmatprep.subr.mxu0 0.0
        %696 = vmatpush2.msra.mxu0 0.0
        %697 = vmatprep.subr.mxu0 0.0
        %698 = vmatpush2.msra.mxu0 0.0
        %699 = vmatprep.subr.mxu0 0.0
        %700 = vmatpush2.msra.mxu0 0.0
        %701 = vmatprep.subr.mxu0 0.0
        %702 = vmatpush2.msra.mxu0 0.0
        %703 = vmatprep.subr.mxu0 0.0
        %704 = vmatpush2.msra.mxu0 0.0
        %705 = vmatprep.subr.mxu0 0.0
        %706 = vmatpush2.msra.mxu0 0.0
        %707 = vmatprep.subr.mxu0 0.0
        %708 = vmatpush2.msra.mxu0 0.0
        %709 = vmatprep.subr.mxu0 0.0
        %710 = vmatpush2.msra.mxu0 0.0
        %711 = vmatprep.subr.mxu0 0.0
        %712 = vmatpush2.msra.mxu0 0.0
        %713 = vmatprep.subr.mxu0 0.0
        %714 = vmatpush2.msra.mxu0 0.0
        %715 = vmatprep.mubr.f32.mxu0 0.0
        %716 = vmatmul.mubr.f32.gmra.mxu0 %v432
        %v717 = vpop.f32.mrf.mxu0
        %v718 = vadd.f32 %v648, %v717
        %v719 = vpop.f32.mrf.mxu0
        %720 = vdwg.mxu0
        %v721 = vadd.f32 %v284, %v718
        %722 = vst [vmem:[#allocation2] sm:$0x3] %v721
        %p723 = scmp.eq.s32.totalorder %s21, 6
        // Predicated region
        $region57: #{cnn_forward.3} parent=39 // pred_check
          %p724 = pneg %p723
        $region58: #{cnn_forward.3} parent=39 // pred_check_branch
          %726 = sbr.rel (%p724) target = $region60
        $region59: #{cnn_forward.3} parent=39 // pred_region
          %v727 = vld [vmem:[#allocation2] sm:$0x3]
          %v728 = vld [vmem:[#allocation6] sm:$0x1]
          %v730 = vlaneseq
          %v731 = vshrl.u32 %v730, 7
          %v732 = vsub.s32 0, %v731
          %v733 = vrot.slane %v728, %v732
          %v735 = vadd.f32 %v727, %v733
          %v736 = vmax.f32 %v735, 0.0
          %v737 = vld [vmem:[%s3] sm:$0xff]
          %v738 = vld [vmem:[%s3 + $0x8] sm:$0xff]
          %v739 = vld [vmem:[%s3 + $0x10] sm:$0xff]
          %v740 = vld [vmem:[%s3 + $0x18] sm:$0xff]
          %v741 = vld [vmem:[%s3 + $0x20] sm:$0xff]
          %v742 = vld [vmem:[%s3 + $0x28] sm:$0xff]
          %v743 = vld [vmem:[%s3 + $0x30] sm:$0xff]
          %v744 = vld [vmem:[%s3 + $0x38] sm:$0xff]
          %v745 = vld [vmem:[%s3 + $0x40] sm:$0xff]
          %v746 = vld [vmem:[%s3 + $0x48] sm:$0xff]
          %v747 = vld [vmem:[%s3 + $0x50] sm:$0xff]
          %v748 = vld [vmem:[%s3 + $0x58] sm:$0xff]
          %v749 = vld [vmem:[%s3 + $0x60] sm:$0xff]
          %v750 = vld [vmem:[%s3 + $0x68] sm:$0xff]
          %v751 = vld [vmem:[%s3 + $0x70] sm:$0xff]
          %v752 = vld [vmem:[%s3 + $0x78] sm:$0xff]
          %v753 = vld [vmem:[#allocation8] sm:$0x1]
          %v755 = vlaneseq
          %v756 = vshrl.u32 %v755, 7
          %v757 = vsub.s32 0, %v756
          %v758 = vrot.slane %v753, %v757
          %760 = vmatprep.subr.mxu0 0.0
          %761 = vmatpush1.msra.mxu0 %v752
          %762 = vmatprep.subr.mxu0 0.0
          %763 = vmatpush1.msra.mxu0 %v751
          %764 = vmatprep.subr.mxu0 0.0
          %765 = vmatpush1.msra.mxu0 %v750
          %766 = vmatprep.subr.mxu0 0.0
          %767 = vmatpush1.msra.mxu0 %v749
          %768 = vmatprep.subr.mxu0 0.0
          %769 = vmatpush1.msra.mxu0 %v748
          %770 = vmatprep.subr.mxu0 0.0
          %771 = vmatpush1.msra.mxu0 %v747
          %772 = vmatprep.subr.mxu0 0.0
          %773 = vmatpush1.msra.mxu0 %v746
          %774 = vmatprep.subr.mxu0 0.0
          %775 = vmatpush1.msra.mxu0 %v745
          %776 = vmatprep.subr.mxu0 0.0
          %777 = vmatpush1.msra.mxu0 %v744
          %778 = vmatprep.subr.mxu0 0.0
          %779 = vmatpush1.msra.mxu0 %v743
          %780 = vmatprep.subr.mxu0 0.0
          %781 = vmatpush1.msra.mxu0 %v742
          %782 = vmatprep.subr.mxu0 0.0
          %783 = vmatpush1.msra.mxu0 %v741
          %784 = vmatprep.subr.mxu0 0.0
          %785 = vmatpush1.msra.mxu0 %v740
          %786 = vmatprep.subr.mxu0 0.0
          %787 = vmatpush1.msra.mxu0 %v739
          %788 = vmatprep.subr.mxu0 0.0
          %789 = vmatpush1.msra.mxu0 %v738
          %790 = vmatprep.subr.mxu0 0.0
          %791 = vmatpush1.msra.mxu0 %v737
          %792 = vmatprep.subr.mxu0 0.0
          %793 = vmatpush2.msra.mxu0 0.0
          %794 = vmatprep.subr.mxu0 0.0
          %795 = vmatpush2.msra.mxu0 0.0
          %796 = vmatprep.subr.mxu0 0.0
          %797 = vmatpush2.msra.mxu0 0.0
          %798 = vmatprep.subr.mxu0 0.0
          %799 = vmatpush2.msra.mxu0 0.0
          %800 = vmatprep.subr.mxu0 0.0
          %801 = vmatpush2.msra.mxu0 0.0
          %802 = vmatprep.subr.mxu0 0.0
          %803 = vmatpush2.msra.mxu0 0.0
          %804 = vmatprep.subr.mxu0 0.0
          %805 = vmatpush2.msra.mxu0 0.0
          %806 = vmatprep.subr.mxu0 0.0
          %807 = vmatpush2.msra.mxu0 0.0
          %808 = vmatprep.subr.mxu0 0.0
          %809 = vmatpush2.msra.mxu0 0.0
          %810 = vmatprep.subr.mxu0 0.0
          %811 = vmatpush2.msra.mxu0 0.0
          %812 = vmatprep.subr.mxu0 0.0
          %813 = vmatpush2.msra.mxu0 0.0
          %814 = vmatprep.subr.mxu0 0.0
          %815 = vmatpush2.msra.mxu0 0.0
          %816 = vmatprep.subr.mxu0 0.0
          %817 = vmatpush2.msra.mxu0 0.0
          %818 = vmatprep.subr.mxu0 0.0
          %819 = vmatpush2.msra.mxu0 0.0
          %820 = vmatprep.subr.mxu0 0.0
          %821 = vmatpush2.msra.mxu0 0.0
          %822 = vmatprep.subr.mxu0 0.0
          %823 = vmatpush2.msra.mxu0 0.0
          %824 = vmatprep.mubr.f32.mxu0 0.0
          %825 = vmatmul.mubr.f32.gmra.mxu0 %v736
          %v826 = vpop.f32.mrf.mxu0
          %v827 = vadd.f32 %v758, %v826
          %v828 = vpop.f32.mrf.mxu0
          %829 = vdwg.mxu0
          %vm830 = vcmask 74752
          %831 = vst.msk [vmem:[#allocation9] sm:$0x3] %vm830, %v827
        $region60: #{cnn_forward.3} parent=39 // pred_fallthru
          _
        // Predicated region
        $region61: #{cnn_forward.3} parent=39 // pred_check
          %p832 = pneg %p149
        $region62: #{cnn_forward.3} parent=39 // pred_check_branch
          %834 = sbr.rel (%p832) target = $region64
        $region63: #{cnn_forward.3} parent=39 // pred_region
          %s836 = ssub.s32 32, 32
          %837 = vsyncadd [#allocation5], %s836
          %s839 = sshll.u32 [#allocation9], 4
          %s840 = int_to_ptr.vmem [resolvable:$true] %s839
          %842 = dma.vmem_to_hbm [thread:$0]  %s840, 32, %s5, [#allocation5]
        $region64: #{cnn_forward.3} parent=39 // pred_fallthru
          _
        // Predicated region
        $region65: #{cnn_forward.3} parent=39 // pred_check
          %p843 = pneg %p149
        $region66: #{cnn_forward.3} parent=39 // pred_check_branch
          %845 = sbr.rel (%p843) target = $region68
        $region67: #{cnn_forward.3} parent=39 // pred_region
          %846 = dma.done [#allocation5], 32
        $region68: #{cnn_forward.3} parent=39 // pred_fallthru
          _
      $region40: #{cnn_forward.3} parent=5 // pred_fallthru
        _
      %p847 = scmp.le.s32.totalorder 2, %s16
      // Predicated region
      $region69: #{cnn_forward.3} parent=5 // pred_check
        %p848 = pneg %p847
      $region70: #{cnn_forward.3} parent=5 // pred_check_branch
        %850 = sbr.rel (%p848) target = $region72
      $region71: #{cnn_forward.3} parent=5 // pred_region
        %s851 = ssub.s32 %s16, 2
      $region72: #{cnn_forward.3} parent=5 // pred_fallthru
        _
    $region6: #{cnn_forward.3} parent=1 // loop_footer
      %s20 = sadd.s32 1, %s16
    $region7: #{cnn_forward.3} parent=1 // loop_footer_branch
      %15 = sbr.rel target = $region3
    $region8: #{cnn_forward.3} parent=1 // loop_exit
      _
    %852 = vsyncpa [#allocation4], 1
    %s853 = scalar_lea.sflag [#allocation4], 1
    %854 = vsyncpa %s853, 1
    %855 = vsyncpa [#allocation7], 1
    %856 = vsyncpa [#allocation5], 1
    %s857 = scalar_lea.sflag [#allocation5], 1
    %858 = vsyncpa %s857, 1

// kernel: cnn_forward.2
$region0: #{cnn_forward.2}
  #allocation0 [shape = 'u32[]', space=smem, size = 0x4, offset = 0x4, fixed_abs, tag = 'smem constant byte address 0x4 - core index']
  #allocation1 [shape = 'u32[144,128]{1,0:T(1,128)}', space=vmem, size = 0x12000, scoped, tag = 'internal scratch']
  %s0 = inlined_call_operand.vmem [shape: f32[392,16], index: 0, kind: input, shape index: {}]
  %s1 = inlined_call_operand.hbm [shape: f32[16,128], index: 1, kind: input, shape index: {}]
  %s2 = inlined_call_operand.hbm [shape: f32[1,32], index: 2, kind: input, shape index: {}]
  %s3 = inlined_call_operand.vmem [shape: f32[392,32], index: 3, kind: output, shape index: {}]
  %s4 = sld [smem:[#allocation0]]
  $region30: #{cnn_forward.2} parent=0
    _
  %s6 = ssub.s32 1, %s4
  %s7 = scalar_select 0, %s6, %s4
  $region1: #{cnn_forward.2} parent=0
    #allocation2 [shape = 'u8[8192]{0}', space=vmem, size = 0x2000, scoped, tag = 'input window, operand 1, single buffered']
    #allocation3 [shape = 's32[1]{0}', space=sflag, size = 0x4, scoped, tag = 'scoped memory for cnn_forward.2']
    #allocation4 [shape = 'u8[512]{0}', space=vmem, size = 0x400, scoped, tag = 'input window, operand 2, single buffered']
    #allocation5 [shape = 's32[1]{0}', space=sflag, size = 0x4, scoped, tag = 'scoped memory for cnn_forward.2']
    %8 = vsyncpa [#allocation3], 0
    %9 = vsyncpa [#allocation5], 0
    // Predicated region
    $region2: #{cnn_forward.2} parent=1 // pred_check
      _
    $region3: #{cnn_forward.2} parent=1 // pred_check_branch
      %11 = sbr.rel (0) target = $region5
    $region4: #{cnn_forward.2} parent=1 // pred_region
      _
    $region5: #{cnn_forward.2} parent=1 // pred_fallthru
      _
    // Predicated region
    $region6: #{cnn_forward.2} parent=1 // pred_check
      _
    $region7: #{cnn_forward.2} parent=1 // pred_check_branch
      %13 = sbr.rel (0) target = $region9
    $region8: #{cnn_forward.2} parent=1 // pred_region
      %s15 = ssub.s32 256, 256
      %16 = vsyncadd [#allocation3], %s15
      %s17 = sshll.u32 [#allocation2], 4
      %s18 = int_to_ptr.vmem [resolvable:$true] %s17
      %23 = dma.hbm_to_vmem [thread:$0]  %s1, 256, %s18, [#allocation3], 128, 128, 8
    $region9: #{cnn_forward.2} parent=1 // pred_fallthru
      _
    // Predicated region
    $region10: #{cnn_forward.2} parent=1 // pred_check
      _
    $region11: #{cnn_forward.2} parent=1 // pred_check_branch
      %25 = sbr.rel (0) target = $region13
    $region12: #{cnn_forward.2} parent=1 // pred_region
      %s27 = ssub.s32 16, 16
      %28 = vsyncadd [#allocation5], %s27
      %s30 = sshll.u32 [#allocation4], 4
      %s31 = int_to_ptr.vmem [resolvable:$true] %s30
      %33 = dma.hbm_to_vmem [thread:$0]  %s2, 16, %s31, [#allocation5]
    $region13: #{cnn_forward.2} parent=1 // pred_fallthru
      _
    // Predicated region
    $region14: #{cnn_forward.2} parent=1 // pred_check
      _
    $region15: #{cnn_forward.2} parent=1 // pred_check_branch
      %35 = sbr.rel (0) target = $region17
    $region16: #{cnn_forward.2} parent=1 // pred_region
      %36 = dma.done [#allocation3], 256
    $region17: #{cnn_forward.2} parent=1 // pred_fallthru
      _
    // Predicated region
    $region18: #{cnn_forward.2} parent=1 // pred_check
      _
    $region19: #{cnn_forward.2} parent=1 // pred_check_branch
      %38 = sbr.rel (0) target = $region21
    $region20: #{cnn_forward.2} parent=1 // pred_region
      %39 = dma.done [#allocation5], 16
    $region21: #{cnn_forward.2} parent=1 // pred_fallthru
      _
    %v40 = vld [vmem:[%s0] sm:$0xff]
    %v41 = vld [vmem:[%s0 + $0x8] sm:$0xff]
    %v42 = vld [vmem:[%s0 + $0x10] sm:$0xff]
    %v43 = vld [vmem:[%s0 + $0x18] sm:$0xff]
    %v44 = vld [vmem:[%s0 + $0x20] sm:$0xff]
    %v45 = vld [vmem:[%s0 + $0x28] sm:$0xff]
    %v46 = vld [vmem:[%s0 + $0x30] sm:$0xff]
    %v47 = vld [vmem:[%s0 + $0x38] sm:$0xff]
    %v48 = vld [vmem:[%s0 + $0x40] sm:$0xff]
    %v49 = vld [vmem:[%s0 + $0x48] sm:$0xff]
    %v50 = vld [vmem:[%s0 + $0x50] sm:$0xff]
    %v51 = vld [vmem:[%s0 + $0x58] sm:$0xff]
    %v52 = vld [vmem:[%s0 + $0x60] sm:$0xff]
    %v53 = vld [vmem:[%s0 + $0x68] sm:$0xff]
    %v54 = vld [vmem:[%s0 + $0x70] sm:$0xff]
    %v55 = vld [vmem:[%s0 + $0x78] sm:$0xff]
    %v56 = vld [vmem:[%s0 + $0x80] sm:$0xff]
    %v57 = vld [vmem:[%s0 + $0x88] sm:$0xff]
    %v58 = vld [vmem:[%s0 + $0x90] sm:$0xff]
    %v59 = vld [vmem:[%s0 + $0x98] sm:$0xff]
    %v60 = vld [vmem:[%s0 + $0xa0] sm:$0xff]
    %v61 = vld [vmem:[%s0 + $0xa8] sm:$0xff]
    %v62 = vld [vmem:[%s0 + $0xb0] sm:$0xff]
    %v63 = vld [vmem:[%s0 + $0xb8] sm:$0xff]
    %v64 = vld [vmem:[%s0 + $0xc0] sm:$0xff]
    %v65 = vld [vmem:[%s0 + $0xc8] sm:$0xff]
    %v66 = vld [vmem:[%s0 + $0xd0] sm:$0xff]
    %v67 = vld [vmem:[%s0 + $0xd8] sm:$0xff]
    %v68 = vld [vmem:[%s0 + $0xe0] sm:$0xff]
    %v69 = vld [vmem:[%s0 + $0xe8] sm:$0xff]
    %v70 = vld [vmem:[%s0 + $0xf0] sm:$0xff]
    %v71 = vld [vmem:[%s0 + $0xf8] sm:$0xff]
    %v72 = vld [vmem:[%s0 + $0x100] sm:$0xff]
    %v73 = vld [vmem:[%s0 + $0x108] sm:$0xff]
    %v74 = vld [vmem:[%s0 + $0x110] sm:$0xff]
    %v75 = vld [vmem:[%s0 + $0x118] sm:$0xff]
    %v76 = vld [vmem:[%s0 + $0x120] sm:$0xff]
    %v77 = vld [vmem:[%s0 + $0x128] sm:$0xff]
    %v78 = vld [vmem:[%s0 + $0x130] sm:$0xff]
    %v79 = vld [vmem:[%s0 + $0x138] sm:$0xff]
    %v80 = vld [vmem:[%s0 + $0x140] sm:$0xff]
    %v81 = vld [vmem:[%s0 + $0x148] sm:$0xff]
    %v82 = vld [vmem:[%s0 + $0x150] sm:$0xff]
    %v83 = vld [vmem:[%s0 + $0x158] sm:$0xff]
    %v84 = vld [vmem:[%s0 + $0x160] sm:$0xff]
    %v85 = vld [vmem:[%s0 + $0x168] sm:$0xff]
    %v86 = vld [vmem:[%s0 + $0x170] sm:$0xff]
    %v87 = vld [vmem:[%s0 + $0x178] sm:$0xff]
    %v88 = vld [vmem:[%s0 + $0x180] sm:$0xff]
    %v89 = vld [vmem:[#allocation2] sm:$0xff]
    %v90 = vld [vmem:[#allocation2 + $0x8] sm:$0xff]
    %vm91 = vcmask 130048
    %v93 = vsel %vm91, %v40, 0
    %v96 = vsel %vm91, %v41, 0
    %v99 = vsel %vm91, %v42, 0
    %v102 = vsel %vm91, %v43, 0
    %v105 = vsel %vm91, %v44, 0
    %v108 = vsel %vm91, %v45, 0
    %v111 = vsel %vm91, %v46, 0
    %v114 = vsel %vm91, %v47, 0
    %v117 = vsel %vm91, %v48, 0
    %v120 = vsel %vm91, %v49, 0
    %v123 = vsel %vm91, %v50, 0
    %v126 = vsel %vm91, %v51, 0
    %v129 = vsel %vm91, %v52, 0
    %v132 = vsel %vm91, %v53, 0
    %v135 = vsel %vm91, %v54, 0
    %v138 = vsel %vm91, %v55, 0
    %v141 = vsel %vm91, %v56, 0
    %v144 = vsel %vm91, %v57, 0
    %v147 = vsel %vm91, %v58, 0
    %v150 = vsel %vm91, %v59, 0
    %v153 = vsel %vm91, %v60, 0
    %v156 = vsel %vm91, %v61, 0
    %v159 = vsel %vm91, %v62, 0
    %v162 = vsel %vm91, %v63, 0
    %v165 = vsel %vm91, %v64, 0
    %v168 = vsel %vm91, %v65, 0
    %v171 = vsel %vm91, %v66, 0
    %v174 = vsel %vm91, %v67, 0
    %v177 = vsel %vm91, %v68, 0
    %v180 = vsel %vm91, %v69, 0
    %v183 = vsel %vm91, %v70, 0
    %v186 = vsel %vm91, %v71, 0
    %v189 = vsel %vm91, %v72, 0
    %v192 = vsel %vm91, %v73, 0
    %v195 = vsel %vm91, %v74, 0
    %v198 = vsel %vm91, %v75, 0
    %v201 = vsel %vm91, %v76, 0
    %v204 = vsel %vm91, %v77, 0
    %v207 = vsel %vm91, %v78, 0
    %v210 = vsel %vm91, %v79, 0
    %v213 = vsel %vm91, %v80, 0
    %v216 = vsel %vm91, %v81, 0
    %v219 = vsel %vm91, %v82, 0
    %v222 = vsel %vm91, %v83, 0
    %v225 = vsel %vm91, %v84, 0
    %v228 = vsel %vm91, %v85, 0
    %v231 = vsel %vm91, %v86, 0
    %v234 = vsel %vm91, %v87, 0
    %v237 = vsel %vm91, %v88, 0
    %239 = vmatprep.subr.mxu0 0.0
    %240 = vmatpush1.msra.mxu0 0.0
    %241 = vmatprep.subr.mxu0 0.0
    %242 = vmatpush1.msra.mxu0 0.0
    %243 = vmatprep.subr.mxu0 0.0
    %244 = vmatpush1.msra.mxu0 0.0
    %245 = vmatprep.subr.mxu0 0.0
    %246 = vmatpush1.msra.mxu0 0.0
    %247 = vmatprep.subr.mxu0 0.0
    %248 = vmatpush1.msra.mxu0 0.0
    %249 = vmatprep.subr.mxu0 0.0
    %250 = vmatpush1.msra.mxu0 0.0
    %251 = vmatprep.subr.mxu0 0.0
    %252 = vmatpush1.msra.mxu0 0.0
    %253 = vmatprep.subr.mxu0 0.0
    %254 = vmatpush1.msra.mxu0 0.0
    %255 = vmatprep.subr.mxu0 0.0
    %256 = vmatpush1.msra.mxu0 0.0
    %257 = vmatprep.subr.mxu0 0.0
    %258 = vmatpush1.msra.mxu0 0.0
    %259 = vmatprep.subr.mxu0 0.0
    %260 = vmatpush1.msra.mxu0 0.0
    %261 = vmatprep.subr.mxu0 0.0
    %262 = vmatpush1.msra.mxu0 0.0
    %263 = vmatprep.subr.mxu0 0.0
    %264 = vmatpush1.msra.mxu0 0.0
    %265 = vmatprep.subr.mxu0 0.0
    %266 = vmatpush1.msra.mxu0 0.0
    %267 = vmatprep.subr.mxu0 0.0
    %268 = vmatpush1.msra.mxu0 %v90
    %269 = vmatprep.subr.mxu0 0.0
    %270 = vmatpush1.msra.mxu0 %v89
    %271 = vmatprep.subr.mxu0 0.0
    %272 = vmatpush2.msra.mxu0 0.0
    %273 = vmatprep.subr.mxu0 0.0
    %274 = vmatpush2.msra.mxu0 0.0
    %275 = vmatprep.subr.mxu0 0.0
    %276 = vmatpush2.msra.mxu0 0.0
    %277 = vmatprep.subr.mxu0 0.0
    %278 = vmatpush2.msra.mxu0 0.0
    %279 = vmatprep.subr.mxu0 0.0
    %280 = vmatpush2.msra.mxu0 0.0
    %281 = vmatprep.subr.mxu0 0.0
    %282 = vmatpush2.msra.mxu0 0.0
    %283 = vmatprep.subr.mxu0 0.0
    %284 = vmatpush2.msra.mxu0 0.0
    %285 = vmatprep.subr.mxu0 0.0
    %286 = vmatpush2.msra.mxu0 0.0
    %287 = vmatprep.subr.mxu0 0.0
    %288 = vmatpush2.msra.mxu0 0.0
    %289 = vmatprep.subr.mxu0 0.0
    %290 = vmatpush2.msra.mxu0 0.0
    %291 = vmatprep.subr.mxu0 0.0
    %292 = vmatpush2.msra.mxu0 0.0
    %293 = vmatprep.subr.mxu0 0.0
    %294 = vmatpush2.msra.mxu0 0.0
    %295 = vmatprep.subr.mxu0 0.0
    %296 = vmatpush2.msra.mxu0 0.0
    %297 = vmatprep.subr.mxu0 0.0
    %298 = vmatpush2.msra.mxu0 0.0
    %299 = vmatprep.subr.mxu0 0.0
    %300 = vmatpush2.msra.mxu0 0.0
    %301 = vmatprep.subr.mxu0 0.0
    %302 = vmatpush2.msra.mxu0 0.0
    %303 = vmatprep.mubr.f32.mxu0 0.0
    %304 = vmatmul.mubr.f32.gmra.mxu0 %v93
    %v305 = vpop.f32.mrf.mxu0
    %v306 = vadd.f32 0.0, %v305
    %v307 = vpop.f32.mrf.mxu0
    %308 = vmatprep.mubr.f32.mxu0 0.0
    %309 = vmatmul.mubr.f32.gmra.mxu0 %v96
    %v310 = vpop.f32.mrf.mxu0
    %v311 = vadd.f32 0.0, %v310
    %v312 = vpop.f32.mrf.mxu0
    %313 = vmatprep.mubr.f32.mxu0 0.0
    %314 = vmatmul.mubr.f32.gmra.mxu0 %v99
    %v315 = vpop.f32.mrf.mxu0
    %v316 = vadd.f32 0.0, %v315
    %v317 = vpop.f32.mrf.mxu0
    %318 = vmatprep.mubr.f32.mxu0 0.0
    %319 = vmatmul.mubr.f32.gmra.mxu0 %v102
    %v320 = vpop.f32.mrf.mxu0
    %v321 = vadd.f32 0.0, %v320
    %v322 = vpop.f32.mrf.mxu0
    %323 = vmatprep.mubr.f32.mxu0 0.0
    %324 = vmatmul.mubr.f32.gmra.mxu0 %v105
    %v325 = vpop.f32.mrf.mxu0
    %v326 = vadd.f32 0.0, %v325
    %v327 = vpop.f32.mrf.mxu0
    %328 = vmatprep.mubr.f32.mxu0 0.0
    %329 = vmatmul.mubr.f32.gmra.mxu0 %v108
    %v330 = vpop.f32.mrf.mxu0
    %v331 = vadd.f32 0.0, %v330
    %v332 = vpop.f32.mrf.mxu0
    %333 = vmatprep.mubr.f32.mxu0 0.0
    %334 = vmatmul.mubr.f32.gmra.mxu0 %v111
    %v335 = vpop.f32.mrf.mxu0
    %v336 = vadd.f32 0.0, %v335
    %v337 = vpop.f32.mrf.mxu0
    %338 = vmatprep.mubr.f32.mxu0 0.0
    %339 = vmatmul.mubr.f32.gmra.mxu0 %v114
    %v340 = vpop.f32.mrf.mxu0
    %v341 = vadd.f32 0.0, %v340
    %v342 = vpop.f32.mrf.mxu0
    %343 = vmatprep.mubr.f32.mxu0 0.0
    %344 = vmatmul.mubr.f32.gmra.mxu0 %v117
    %v345 = vpop.f32.mrf.mxu0
    %v346 = vadd.f32 0.0, %v345
    %v347 = vpop.f32.mrf.mxu0
    %348 = vmatprep.mubr.f32.mxu0 0.0
    %349 = vmatmul.mubr.f32.gmra.mxu0 %v120
    %v350 = vpop.f32.mrf.mxu0
    %v351 = vadd.f32 0.0, %v350
    %v352 = vpop.f32.mrf.mxu0
    %353 = vmatprep.mubr.f32.mxu0 0.0
    %354 = vmatmul.mubr.f32.gmra.mxu0 %v123
    %v355 = vpop.f32.mrf.mxu0
    %v356 = vadd.f32 0.0, %v355
    %v357 = vpop.f32.mrf.mxu0
    %358 = vmatprep.mubr.f32.mxu0 0.0
    %359 = vmatmul.mubr.f32.gmra.mxu0 %v126
    %v360 = vpop.f32.mrf.mxu0
    %v361 = vadd.f32 0.0, %v360
    %v362 = vpop.f32.mrf.mxu0
    %363 = vmatprep.mubr.f32.mxu0 0.0
    %364 = vmatmul.mubr.f32.gmra.mxu0 %v129
    %v365 = vpop.f32.mrf.mxu0
    %v366 = vadd.f32 0.0, %v365
    %v367 = vpop.f32.mrf.mxu0
    %368 = vmatprep.mubr.f32.mxu0 0.0
    %369 = vmatmul.mubr.f32.gmra.mxu0 %v132
    %v370 = vpop.f32.mrf.mxu0
    %v371 = vadd.f32 0.0, %v370
    %v372 = vpop.f32.mrf.mxu0
    %373 = vmatprep.mubr.f32.mxu0 0.0
    %374 = vmatmul.mubr.f32.gmra.mxu0 %v135
    %v375 = vpop.f32.mrf.mxu0
    %v376 = vadd.f32 0.0, %v375
    %v377 = vpop.f32.mrf.mxu0
    %378 = vmatprep.mubr.f32.mxu0 0.0
    %379 = vmatmul.mubr.f32.gmra.mxu0 %v138
    %v380 = vpop.f32.mrf.mxu0
    %v381 = vadd.f32 0.0, %v380
    %v382 = vpop.f32.mrf.mxu0
    %383 = vmatprep.mubr.f32.mxu0 0.0
    %384 = vmatmul.mubr.f32.gmra.mxu0 %v141
    %v385 = vpop.f32.mrf.mxu0
    %v386 = vadd.f32 0.0, %v385
    %v387 = vpop.f32.mrf.mxu0
    %388 = vmatprep.mubr.f32.mxu0 0.0
    %389 = vmatmul.mubr.f32.gmra.mxu0 %v144
    %v390 = vpop.f32.mrf.mxu0
    %v391 = vadd.f32 0.0, %v390
    %v392 = vpop.f32.mrf.mxu0
    %393 = vmatprep.mubr.f32.mxu0 0.0
    %394 = vmatmul.mubr.f32.gmra.mxu0 %v147
    %v395 = vpop.f32.mrf.mxu0
    %v396 = vadd.f32 0.0, %v395
    %v397 = vpop.f32.mrf.mxu0
    %398 = vmatprep.mubr.f32.mxu0 0.0
    %399 = vmatmul.mubr.f32.gmra.mxu0 %v150
    %v400 = vpop.f32.mrf.mxu0
    %v401 = vadd.f32 0.0, %v400
    %v402 = vpop.f32.mrf.mxu0
    %403 = vmatprep.mubr.f32.mxu0 0.0
    %404 = vmatmul.mubr.f32.gmra.mxu0 %v153
    %v405 = vpop.f32.mrf.mxu0
    %v406 = vadd.f32 0.0, %v405
    %v407 = vpop.f32.mrf.mxu0
    %408 = vmatprep.mubr.f32.mxu0 0.0
    %409 = vmatmul.mubr.f32.gmra.mxu0 %v156
    %v410 = vpop.f32.mrf.mxu0
    %v411 = vadd.f32 0.0, %v410
    %v412 = vpop.f32.mrf.mxu0
    %413 = vmatprep.mubr.f32.mxu0 0.0
    %414 = vmatmul.mubr.f32.gmra.mxu0 %v159
    %v415 = vpop.f32.mrf.mxu0
    %v416 = vadd.f32 0.0, %v415
    %v417 = vpop.f32.mrf.mxu0
    %418 = vmatprep.mubr.f32.mxu0 0.0
    %419 = vmatmul.mubr.f32.gmra.mxu0 %v162
    %v420 = vpop.f32.mrf.mxu0
    %v421 = vadd.f32 0.0, %v420
    %v422 = vpop.f32.mrf.mxu0
    %423 = vmatprep.mubr.f32.mxu0 0.0
    %424 = vmatmul.mubr.f32.gmra.mxu0 %v165
    %v425 = vpop.f32.mrf.mxu0
    %v426 = vadd.f32 0.0, %v425
    %v427 = vpop.f32.mrf.mxu0
    %428 = vmatprep.mubr.f32.mxu0 0.0
    %429 = vmatmul.mubr.f32.gmra.mxu0 %v168
    %v430 = vpop.f32.mrf.mxu0
    %v431 = vadd.f32 0.0, %v430
    %v432 = vpop.f32.mrf.mxu0
    %433 = vmatprep.mubr.f32.mxu0 0.0
    %434 = vmatmul.mubr.f32.gmra.mxu0 %v171
    %v435 = vpop.f32.mrf.mxu0
    %v436 = vadd.f32 0.0, %v435
    %v437 = vpop.f32.mrf.mxu0
    %438 = vmatprep.mubr.f32.mxu0 0.0
    %439 = vmatmul.mubr.f32.gmra.mxu0 %v174
    %v440 = vpop.f32.mrf.mxu0
    %v441 = vadd.f32 0.0, %v440
    %v442 = vpop.f32.mrf.mxu0
    %443 = vmatprep.mubr.f32.mxu0 0.0
    %444 = vmatmul.mubr.f32.gmra.mxu0 %v177
    %v445 = vpop.f32.mrf.mxu0
    %v446 = vadd.f32 0.0, %v445
    %v447 = vpop.f32.mrf.mxu0
    %448 = vmatprep.mubr.f32.mxu0 0.0
    %449 = vmatmul.mubr.f32.gmra.mxu0 %v180
    %v450 = vpop.f32.mrf.mxu0
    %v451 = vadd.f32 0.0, %v450
    %v452 = vpop.f32.mrf.mxu0
    %453 = vmatprep.mubr.f32.mxu0 0.0
    %454 = vmatmul.mubr.f32.gmra.mxu0 %v183
    %v455 = vpop.f32.mrf.mxu0
    %v456 = vadd.f32 0.0, %v455
    %v457 = vpop.f32.mrf.mxu0
    %458 = vmatprep.mubr.f32.mxu0 0.0
    %459 = vmatmul.mubr.f32.gmra.mxu0 %v186
    %v460 = vpop.f32.mrf.mxu0
    %v461 = vadd.f32 0.0, %v460
    %v462 = vpop.f32.mrf.mxu0
    %463 = vmatprep.mubr.f32.mxu0 0.0
    %464 = vmatmul.mubr.f32.gmra.mxu0 %v189
    %v465 = vpop.f32.mrf.mxu0
    %v466 = vadd.f32 0.0, %v465
    %v467 = vpop.f32.mrf.mxu0
    %468 = vmatprep.mubr.f32.mxu0 0.0
    %469 = vmatmul.mubr.f32.gmra.mxu0 %v192
    %v470 = vpop.f32.mrf.mxu0
    %v471 = vadd.f32 0.0, %v470
    %v472 = vpop.f32.mrf.mxu0
    %473 = vmatprep.mubr.f32.mxu0 0.0
    %474 = vmatmul.mubr.f32.gmra.mxu0 %v195
    %v475 = vpop.f32.mrf.mxu0
    %v476 = vadd.f32 0.0, %v475
    %v477 = vpop.f32.mrf.mxu0
    %478 = vmatprep.mubr.f32.mxu0 0.0
    %479 = vmatmul.mubr.f32.gmra.mxu0 %v198
    %v480 = vpop.f32.mrf.mxu0
    %v481 = vadd.f32 0.0, %v480
    %v482 = vpop.f32.mrf.mxu0
    %483 = vmatprep.mubr.f32.mxu0 0.0
    %484 = vmatmul.mubr.f32.gmra.mxu0 %v201
    %v485 = vpop.f32.mrf.mxu0
    %v486 = vadd.f32 0.0, %v485
    %v487 = vpop.f32.mrf.mxu0
    %488 = vmatprep.mubr.f32.mxu0 0.0
    %489 = vmatmul.mubr.f32.gmra.mxu0 %v204
    %v490 = vpop.f32.mrf.mxu0
    %v491 = vadd.f32 0.0, %v490
    %v492 = vpop.f32.mrf.mxu0
    %493 = vmatprep.mubr.f32.mxu0 0.0
    %494 = vmatmul.mubr.f32.gmra.mxu0 %v207
    %v495 = vpop.f32.mrf.mxu0
    %v496 = vadd.f32 0.0, %v495
    %v497 = vpop.f32.mrf.mxu0
    %498 = vmatprep.mubr.f32.mxu0 0.0
    %499 = vmatmul.mubr.f32.gmra.mxu0 %v210
    %v500 = vpop.f32.mrf.mxu0
    %v501 = vadd.f32 0.0, %v500
    %v502 = vpop.f32.mrf.mxu0
    %503 = vmatprep.mubr.f32.mxu0 0.0
    %504 = vmatmul.mubr.f32.gmra.mxu0 %v213
    %v505 = vpop.f32.mrf.mxu0
    %v506 = vadd.f32 0.0, %v505
    %v507 = vpop.f32.mrf.mxu0
    %508 = vmatprep.mubr.f32.mxu0 0.0
    %509 = vmatmul.mubr.f32.gmra.mxu0 %v216
    %v510 = vpop.f32.mrf.mxu0
    %v511 = vadd.f32 0.0, %v510
    %v512 = vpop.f32.mrf.mxu0
    %513 = vmatprep.mubr.f32.mxu0 0.0
    %514 = vmatmul.mubr.f32.gmra.mxu0 %v219
    %v515 = vpop.f32.mrf.mxu0
    %v516 = vadd.f32 0.0, %v515
    %v517 = vpop.f32.mrf.mxu0
    %518 = vmatprep.mubr.f32.mxu0 0.0
    %519 = vmatmul.mubr.f32.gmra.mxu0 %v222
    %v520 = vpop.f32.mrf.mxu0
    %v521 = vadd.f32 0.0, %v520
    %v522 = vpop.f32.mrf.mxu0
    %523 = vmatprep.mubr.f32.mxu0 0.0
    %524 = vmatmul.mubr.f32.gmra.mxu0 %v225
    %v525 = vpop.f32.mrf.mxu0
    %v526 = vadd.f32 0.0, %v525
    %v527 = vpop.f32.mrf.mxu0
    %528 = vmatprep.mubr.f32.mxu0 0.0
    %529 = vmatmul.mubr.f32.gmra.mxu0 %v228
    %v530 = vpop.f32.mrf.mxu0
    %v531 = vadd.f32 0.0, %v530
    %v532 = vpop.f32.mrf.mxu0
    %533 = vmatprep.mubr.f32.mxu0 0.0
    %534 = vmatmul.mubr.f32.gmra.mxu0 %v231
    %v535 = vpop.f32.mrf.mxu0
    %v536 = vadd.f32 0.0, %v535
    %v537 = vpop.f32.mrf.mxu0
    %538 = vmatprep.mubr.f32.mxu0 0.0
    %539 = vmatmul.mubr.f32.gmra.mxu0 %v234
    %v540 = vpop.f32.mrf.mxu0
    %v541 = vadd.f32 0.0, %v540
    %v542 = vpop.f32.mrf.mxu0
    %543 = vmatprep.mubr.f32.mxu0 0.0
    %544 = vmatmul.mubr.f32.gmra.mxu0 %v237
    %v545 = vpop.f32.mrf.mxu0
    %v546 = vadd.f32 0.0, %v545
    %v547 = vpop.f32.mrf.mxu0
    %548 = vdwg.mxu0
    %598 = vrot.lane.b32.xlu0 %v306, 96
    %v599 = vpop.permute.xlu0 %598
    %600 = vrot.lane.b32.xlu0 %v311, 96
    %v601 = vpop.permute.xlu0 %600
    %602 = vrot.lane.b32.xlu0 %v316, 96
    %v603 = vpop.permute.xlu0 %602
    %604 = vrot.lane.b32.xlu0 %v321, 96
    %v605 = vpop.permute.xlu0 %604
    %606 = vrot.lane.b32.xlu0 %v326, 96
    %v607 = vpop.permute.xlu0 %606
    %608 = vrot.lane.b32.xlu0 %v331, 96
    %v609 = vpop.permute.xlu0 %608
    %610 = vrot.lane.b32.xlu0 %v336, 96
    %v611 = vpop.permute.xlu0 %610
    %612 = vrot.lane.b32.xlu0 %v341, 96
    %v613 = vpop.permute.xlu0 %612
    %614 = vrot.lane.b32.xlu0 %v346, 96
    %v615 = vpop.permute.xlu0 %614
    %616 = vrot.lane.b32.xlu0 %v351, 96
    %v617 = vpop.permute.xlu0 %616
    %618 = vrot.lane.b32.xlu0 %v356, 96
    %v619 = vpop.permute.xlu0 %618
    %620 = vrot.lane.b32.xlu0 %v361, 96
    %v621 = vpop.permute.xlu0 %620
    %622 = vrot.lane.b32.xlu0 %v366, 96
    %v623 = vpop.permute.xlu0 %622
    %624 = vrot.lane.b32.xlu0 %v371, 96
    %v625 = vpop.permute.xlu0 %624
    %626 = vrot.lane.b32.xlu0 %v376, 96
    %v627 = vpop.permute.xlu0 %626
    %628 = vrot.lane.b32.xlu0 %v381, 96
    %v629 = vpop.permute.xlu0 %628
    %630 = vrot.lane.b32.xlu0 %v386, 96
    %v631 = vpop.permute.xlu0 %630
    %632 = vrot.lane.b32.xlu0 %v391, 96
    %v633 = vpop.permute.xlu0 %632
    %634 = vrot.lane.b32.xlu0 %v396, 96
    %v635 = vpop.permute.xlu0 %634
    %636 = vrot.lane.b32.xlu0 %v401, 96
    %v637 = vpop.permute.xlu0 %636
    %638 = vrot.lane.b32.xlu0 %v406, 96
    %v639 = vpop.permute.xlu0 %638
    %640 = vrot.lane.b32.xlu0 %v411, 96
    %v641 = vpop.permute.xlu0 %640
    %642 = vrot.lane.b32.xlu0 %v416, 96
    %v643 = vpop.permute.xlu0 %642
    %644 = vrot.lane.b32.xlu0 %v421, 96
    %v645 = vpop.permute.xlu0 %644
    %646 = vrot.lane.b32.xlu0 %v426, 96
    %v647 = vpop.permute.xlu0 %646
    %648 = vrot.lane.b32.xlu0 %v431, 96
    %v649 = vpop.permute.xlu0 %648
    %650 = vrot.lane.b32.xlu0 %v436, 96
    %v651 = vpop.permute.xlu0 %650
    %652 = vrot.lane.b32.xlu0 %v441, 96
    %v653 = vpop.permute.xlu0 %652
    %654 = vrot.lane.b32.xlu0 %v446, 96
    %v655 = vpop.permute.xlu0 %654
    %656 = vrot.lane.b32.xlu0 %v451, 96
    %v657 = vpop.permute.xlu0 %656
    %658 = vrot.lane.b32.xlu0 %v456, 96
    %v659 = vpop.permute.xlu0 %658
    %660 = vrot.lane.b32.xlu0 %v461, 96
    %v661 = vpop.permute.xlu0 %660
    %662 = vrot.lane.b32.xlu0 %v466, 96
    %v663 = vpop.permute.xlu0 %662
    %664 = vrot.lane.b32.xlu0 %v471, 96
    %v665 = vpop.permute.xlu0 %664
    %666 = vrot.lane.b32.xlu0 %v476, 96
    %v667 = vpop.permute.xlu0 %666
    %668 = vrot.lane.b32.xlu0 %v481, 96
    %v669 = vpop.permute.xlu0 %668
    %670 = vrot.lane.b32.xlu0 %v486, 96
    %v671 = vpop.permute.xlu0 %670
    %672 = vrot.lane.b32.xlu0 %v491, 96
    %v673 = vpop.permute.xlu0 %672
    %674 = vrot.lane.b32.xlu0 %v496, 96
    %v675 = vpop.permute.xlu0 %674
    %676 = vrot.lane.b32.xlu0 %v501, 96
    %v677 = vpop.permute.xlu0 %676
    %678 = vrot.lane.b32.xlu0 %v506, 96
    %v679 = vpop.permute.xlu0 %678
    %680 = vrot.lane.b32.xlu0 %v511, 96
    %v681 = vpop.permute.xlu0 %680
    %682 = vrot.lane.b32.xlu0 %v516, 96
    %v683 = vpop.permute.xlu0 %682
    %684 = vrot.lane.b32.xlu0 %v521, 96
    %v685 = vpop.permute.xlu0 %684
    %686 = vrot.lane.b32.xlu0 %v526, 96
    %v687 = vpop.permute.xlu0 %686
    %688 = vrot.lane.b32.xlu0 %v531, 96
    %v689 = vpop.permute.xlu0 %688
    %690 = vrot.lane.b32.xlu0 %v536, 96
    %v691 = vpop.permute.xlu0 %690
    %692 = vrot.lane.b32.xlu0 %v541, 96
    %v693 = vpop.permute.xlu0 %692
    %694 = vrot.lane.b32.xlu0 %v546, 96
    %v695 = vpop.permute.xlu0 %694
    %v745 = vmax.f32 %v306, %v599
    %v746 = vmax.f32 %v311, %v601
    %v747 = vmax.f32 %v316, %v603
    %v748 = vmax.f32 %v321, %v605
    %v749 = vmax.f32 %v326, %v607
    %v750 = vmax.f32 %v331, %v609
    %v751 = vmax.f32 %v336, %v611
    %v752 = vmax.f32 %v341, %v613
    %v753 = vmax.f32 %v346, %v615
    %v754 = vmax.f32 %v351, %v617
    %v755 = vmax.f32 %v356, %v619
    %v756 = vmax.f32 %v361, %v621
    %v757 = vmax.f32 %v366, %v623
    %v758 = vmax.f32 %v371, %v625
    %v759 = vmax.f32 %v376, %v627
    %v760 = vmax.f32 %v381, %v629
    %v761 = vmax.f32 %v386, %v631
    %v762 = vmax.f32 %v391, %v633
    %v763 = vmax.f32 %v396, %v635
    %v764 = vmax.f32 %v401, %v637
    %v765 = vmax.f32 %v406, %v639
    %v766 = vmax.f32 %v411, %v641
    %v767 = vmax.f32 %v416, %v643
    %v768 = vmax.f32 %v421, %v645
    %v769 = vmax.f32 %v426, %v647
    %v770 = vmax.f32 %v431, %v649
    %v771 = vmax.f32 %v436, %v651
    %v772 = vmax.f32 %v441, %v653
    %v773 = vmax.f32 %v446, %v655
    %v774 = vmax.f32 %v451, %v657
    %v775 = vmax.f32 %v456, %v659
    %v776 = vmax.f32 %v461, %v661
    %v777 = vmax.f32 %v466, %v663
    %v778 = vmax.f32 %v471, %v665
    %v779 = vmax.f32 %v476, %v667
    %v780 = vmax.f32 %v481, %v669
    %v781 = vmax.f32 %v486, %v671
    %v782 = vmax.f32 %v491, %v673
    %v783 = vmax.f32 %v496, %v675
    %v784 = vmax.f32 %v501, %v677
    %v785 = vmax.f32 %v506, %v679
    %v786 = vmax.f32 %v511, %v681
    %v787 = vmax.f32 %v516, %v683
    %v788 = vmax.f32 %v521, %v685
    %v789 = vmax.f32 %v526, %v687
    %v790 = vmax.f32 %v531, %v689
    %v791 = vmax.f32 %v536, %v691
    %v792 = vmax.f32 %v541, %v693
    %v793 = vmax.f32 %v546, %v695
    %843 = vrot.lane.b32.xlu0 %v745, 64
    %v844 = vpop.permute.xlu0 %843
    %845 = vrot.lane.b32.xlu0 %v746, 64
    %v846 = vpop.permute.xlu0 %845
    %847 = vrot.lane.b32.xlu0 %v747, 64
    %v848 = vpop.permute.xlu0 %847
    %849 = vrot.lane.b32.xlu0 %v748, 64
    %v850 = vpop.permute.xlu0 %849
    %851 = vrot.lane.b32.xlu0 %v749, 64
    %v852 = vpop.permute.xlu0 %851
    %853 = vrot.lane.b32.xlu0 %v750, 64
    %v854 = vpop.permute.xlu0 %853
    %855 = vrot.lane.b32.xlu0 %v751, 64
    %v856 = vpop.permute.xlu0 %855
    %857 = vrot.lane.b32.xlu0 %v752, 64
    %v858 = vpop.permute.xlu0 %857
    %859 = vrot.lane.b32.xlu0 %v753, 64
    %v860 = vpop.permute.xlu0 %859
    %861 = vrot.lane.b32.xlu0 %v754, 64
    %v862 = vpop.permute.xlu0 %861
    %863 = vrot.lane.b32.xlu0 %v755, 64
    %v864 = vpop.permute.xlu0 %863
    %865 = vrot.lane.b32.xlu0 %v756, 64
    %v866 = vpop.permute.xlu0 %865
    %867 = vrot.lane.b32.xlu0 %v757, 64
    %v868 = vpop.permute.xlu0 %867
    %869 = vrot.lane.b32.xlu0 %v758, 64
    %v870 = vpop.permute.xlu0 %869
    %871 = vrot.lane.b32.xlu0 %v759, 64
    %v872 = vpop.permute.xlu0 %871
    %873 = vrot.lane.b32.xlu0 %v760, 64
    %v874 = vpop.permute.xlu0 %873
    %875 = vrot.lane.b32.xlu0 %v761, 64
    %v876 = vpop.permute.xlu0 %875
    %877 = vrot.lane.b32.xlu0 %v762, 64
    %v878 = vpop.permute.xlu0 %877
    %879 = vrot.lane.b32.xlu0 %v763, 64
    %v880 = vpop.permute.xlu0 %879
    %881 = vrot.lane.b32.xlu0 %v764, 64
    %v882 = vpop.permute.xlu0 %881
    %883 = vrot.lane.b32.xlu0 %v765, 64
    %v884 = vpop.permute.xlu0 %883
    %885 = vrot.lane.b32.xlu0 %v766, 64
    %v886 = vpop.permute.xlu0 %885
    %887 = vrot.lane.b32.xlu0 %v767, 64
    %v888 = vpop.permute.xlu0 %887
    %889 = vrot.lane.b32.xlu0 %v768, 64
    %v890 = vpop.permute.xlu0 %889
    %891 = vrot.lane.b32.xlu0 %v769, 64
    %v892 = vpop.permute.xlu0 %891
    %893 = vrot.lane.b32.xlu0 %v770, 64
    %v894 = vpop.permute.xlu0 %893
    %895 = vrot.lane.b32.xlu0 %v771, 64
    %v896 = vpop.permute.xlu0 %895
    %897 = vrot.lane.b32.xlu0 %v772, 64
    %v898 = vpop.permute.xlu0 %897
    %899 = vrot.lane.b32.xlu0 %v773, 64
    %v900 = vpop.permute.xlu0 %899
    %901 = vrot.lane.b32.xlu0 %v774, 64
    %v902 = vpop.permute.xlu0 %901
    %903 = vrot.lane.b32.xlu0 %v775, 64
    %v904 = vpop.permute.xlu0 %903
    %905 = vrot.lane.b32.xlu0 %v776, 64
    %v906 = vpop.permute.xlu0 %905
    %907 = vrot.lane.b32.xlu0 %v777, 64
    %v908 = vpop.permute.xlu0 %907
    %909 = vrot.lane.b32.xlu0 %v778, 64
    %v910 = vpop.permute.xlu0 %909
    %911 = vrot.lane.b32.xlu0 %v779, 64
    %v912 = vpop.permute.xlu0 %911
    %913 = vrot.lane.b32.xlu0 %v780, 64
    %v914 = vpop.permute.xlu0 %913
    %915 = vrot.lane.b32.xlu0 %v781, 64
    %v916 = vpop.permute.xlu0 %915
    %917 = vrot.lane.b32.xlu0 %v782, 64
    %v918 = vpop.permute.xlu0 %917
    %919 = vrot.lane.b32.xlu0 %v783, 64
    %v920 = vpop.permute.xlu0 %919
    %921 = vrot.lane.b32.xlu0 %v784, 64
    %v922 = vpop.permute.xlu0 %921
    %923 = vrot.lane.b32.xlu0 %v785, 64
    %v924 = vpop.permute.xlu0 %923
    %925 = vrot.lane.b32.xlu0 %v786, 64
    %v926 = vpop.permute.xlu0 %925
    %927 = vrot.lane.b32.xlu0 %v787, 64
    %v928 = vpop.permute.xlu0 %927
    %929 = vrot.lane.b32.xlu0 %v788, 64
    %v930 = vpop.permute.xlu0 %929
    %931 = vrot.lane.b32.xlu0 %v789, 64
    %v932 = vpop.permute.xlu0 %931
    %933 = vrot.lane.b32.xlu0 %v790, 64
    %v934 = vpop.permute.xlu0 %933
    %935 = vrot.lane.b32.xlu0 %v791, 64
    %v936 = vpop.permute.xlu0 %935
    %937 = vrot.lane.b32.xlu0 %v792, 64
    %v938 = vpop.permute.xlu0 %937
    %939 = vrot.lane.b32.xlu0 %v793, 64
    %v940 = vpop.permute.xlu0 %939
    %v990 = vmax.f32 %v745, %v844
    %v991 = vmax.f32 %v746, %v846
    %v992 = vmax.f32 %v747, %v848
    %v993 = vmax.f32 %v748, %v850
    %v994 = vmax.f32 %v749, %v852
    %v995 = vmax.f32 %v750, %v854
    %v996 = vmax.f32 %v751, %v856
    %v997 = vmax.f32 %v752, %v858
    %v998 = vmax.f32 %v753, %v860
    %v999 = vmax.f32 %v754, %v862
    %v1000 = vmax.f32 %v755, %v864
    %v1001 = vmax.f32 %v756, %v866
    %v1002 = vmax.f32 %v757, %v868
    %v1003 = vmax.f32 %v758, %v870
    %v1004 = vmax.f32 %v759, %v872
    %v1005 = vmax.f32 %v760, %v874
    %v1006 = vmax.f32 %v761, %v876
    %v1007 = vmax.f32 %v762, %v878
    %v1008 = vmax.f32 %v763, %v880
    %v1009 = vmax.f32 %v764, %v882
    %v1010 = vmax.f32 %v765, %v884
    %v1011 = vmax.f32 %v766, %v886
    %v1012 = vmax.f32 %v767, %v888
    %v1013 = vmax.f32 %v768, %v890
    %v1014 = vmax.f32 %v769, %v892
    %v1015 = vmax.f32 %v770, %v894
    %v1016 = vmax.f32 %v771, %v896
    %v1017 = vmax.f32 %v772, %v898
    %v1018 = vmax.f32 %v773, %v900
    %v1019 = vmax.f32 %v774, %v902
    %v1020 = vmax.f32 %v775, %v904
    %v1021 = vmax.f32 %v776, %v906
    %v1022 = vmax.f32 %v777, %v908
    %v1023 = vmax.f32 %v778, %v910
    %v1024 = vmax.f32 %v779, %v912
    %v1025 = vmax.f32 %v780, %v914
    %v1026 = vmax.f32 %v781, %v916
    %v1027 = vmax.f32 %v782, %v918
    %v1028 = vmax.f32 %v783, %v920
    %v1029 = vmax.f32 %v784, %v922
    %v1030 = vmax.f32 %v785, %v924
    %v1031 = vmax.f32 %v786, %v926
    %v1032 = vmax.f32 %v787, %v928
    %v1033 = vmax.f32 %v788, %v930
    %v1034 = vmax.f32 %v789, %v932
    %v1035 = vmax.f32 %v790, %v934
    %v1036 = vmax.f32 %v791, %v936
    %v1037 = vmax.f32 %v792, %v938
    %v1038 = vmax.f32 %v793, %v940
    %v1039 = vld [vmem:[#allocation4] sm:$0x1]
    %v1041 = vlaneseq
    %v1042 = vshrl.u32 %v1041, 7
    %v1043 = vsub.s32 0, %v1042
    %v1044 = vrot.slane %v1039, %v1043
    %v1046 = vadd.f32 %v990, %v1044
    %v1047 = vadd.f32 %v991, %v1044
    %v1048 = vadd.f32 %v992, %v1044
    %v1049 = vadd.f32 %v993, %v1044
    %v1050 = vadd.f32 %v994, %v1044
    %v1051 = vadd.f32 %v995, %v1044
    %v1052 = vadd.f32 %v996, %v1044
    %v1053 = vadd.f32 %v997, %v1044
    %v1054 = vadd.f32 %v998, %v1044
    %v1055 = vadd.f32 %v999, %v1044
    %v1056 = vadd.f32 %v1000, %v1044
    %v1057 = vadd.f32 %v1001, %v1044
    %v1058 = vadd.f32 %v1002, %v1044
    %v1059 = vadd.f32 %v1003, %v1044
    %v1060 = vadd.f32 %v1004, %v1044
    %v1061 = vadd.f32 %v1005, %v1044
    %v1062 = vadd.f32 %v1006, %v1044
    %v1063 = vadd.f32 %v1007, %v1044
    %v1064 = vadd.f32 %v1008, %v1044
    %v1065 = vadd.f32 %v1009, %v1044
    %v1066 = vadd.f32 %v1010, %v1044
    %v1067 = vadd.f32 %v1011, %v1044
    %v1068 = vadd.f32 %v1012, %v1044
    %v1069 = vadd.f32 %v1013, %v1044
    %v1070 = vadd.f32 %v1014, %v1044
    %v1071 = vadd.f32 %v1015, %v1044
    %v1072 = vadd.f32 %v1016, %v1044
    %v1073 = vadd.f32 %v1017, %v1044
    %v1074 = vadd.f32 %v1018, %v1044
    %v1075 = vadd.f32 %v1019, %v1044
    %v1076 = vadd.f32 %v1020, %v1044
    %v1077 = vadd.f32 %v1021, %v1044
    %v1078 = vadd.f32 %v1022, %v1044
    %v1079 = vadd.f32 %v1023, %v1044
    %v1080 = vadd.f32 %v1024, %v1044
    %v1081 = vadd.f32 %v1025, %v1044
    %v1082 = vadd.f32 %v1026, %v1044
    %v1083 = vadd.f32 %v1027, %v1044
    %v1084 = vadd.f32 %v1028, %v1044
    %v1085 = vadd.f32 %v1029, %v1044
    %v1086 = vadd.f32 %v1030, %v1044
    %v1087 = vadd.f32 %v1031, %v1044
    %v1088 = vadd.f32 %v1032, %v1044
    %v1089 = vadd.f32 %v1033, %v1044
    %v1090 = vadd.f32 %v1034, %v1044
    %v1091 = vadd.f32 %v1035, %v1044
    %v1092 = vadd.f32 %v1036, %v1044
    %v1093 = vadd.f32 %v1037, %v1044
    %v1094 = vadd.f32 %v1038, %v1044
    %v1095 = vmax.f32 %v1046, 0.0
    %v1096 = vmax.f32 %v1047, 0.0
    %v1097 = vmax.f32 %v1048, 0.0
    %v1098 = vmax.f32 %v1049, 0.0
    %v1099 = vmax.f32 %v1050, 0.0
    %v1100 = vmax.f32 %v1051, 0.0
    %v1101 = vmax.f32 %v1052, 0.0
    %v1102 = vmax.f32 %v1053, 0.0
    %v1103 = vmax.f32 %v1054, 0.0
    %v1104 = vmax.f32 %v1055, 0.0
    %v1105 = vmax.f32 %v1056, 0.0
    %v1106 = vmax.f32 %v1057, 0.0
    %v1107 = vmax.f32 %v1058, 0.0
    %v1108 = vmax.f32 %v1059, 0.0
    %v1109 = vmax.f32 %v1060, 0.0
    %v1110 = vmax.f32 %v1061, 0.0
    %v1111 = vmax.f32 %v1062, 0.0
    %v1112 = vmax.f32 %v1063, 0.0
    %v1113 = vmax.f32 %v1064, 0.0
    %v1114 = vmax.f32 %v1065, 0.0
    %v1115 = vmax.f32 %v1066, 0.0
    %v1116 = vmax.f32 %v1067, 0.0
    %v1117 = vmax.f32 %v1068, 0.0
    %v1118 = vmax.f32 %v1069, 0.0
    %v1119 = vmax.f32 %v1070, 0.0
    %v1120 = vmax.f32 %v1071, 0.0
    %v1121 = vmax.f32 %v1072, 0.0
    %v1122 = vmax.f32 %v1073, 0.0
    %v1123 = vmax.f32 %v1074, 0.0
    %v1124 = vmax.f32 %v1075, 0.0
    %v1125 = vmax.f32 %v1076, 0.0
    %v1126 = vmax.f32 %v1077, 0.0
    %v1127 = vmax.f32 %v1078, 0.0
    %v1128 = vmax.f32 %v1079, 0.0
    %v1129 = vmax.f32 %v1080, 0.0
    %v1130 = vmax.f32 %v1081, 0.0
    %v1131 = vmax.f32 %v1082, 0.0
    %v1132 = vmax.f32 %v1083, 0.0
    %v1133 = vmax.f32 %v1084, 0.0
    %v1134 = vmax.f32 %v1085, 0.0
    %v1135 = vmax.f32 %v1086, 0.0
    %v1136 = vmax.f32 %v1087, 0.0
    %v1137 = vmax.f32 %v1088, 0.0
    %v1138 = vmax.f32 %v1089, 0.0
    %v1139 = vmax.f32 %v1090, 0.0
    %v1140 = vmax.f32 %v1091, 0.0
    %v1141 = vmax.f32 %v1092, 0.0
    %v1142 = vmax.f32 %v1093, 0.0
    %v1143 = vmax.f32 %v1094, 0.0
    %vm1144 = vcmask 261120
    %1145 = vst.msk [vmem:[%s3] sm:$0xff] %vm1144, %v1095
    %1146 = vst.msk [vmem:[%s3 + $0x8] sm:$0xff] %vm1144, %v1096
    %1147 = vst.msk [vmem:[%s3 + $0x10] sm:$0xff] %vm1144, %v1097
    %1148 = vst.msk [vmem:[%s3 + $0x18] sm:$0xff] %vm1144, %v1098
    %1149 = vst.msk [vmem:[%s3 + $0x20] sm:$0xff] %vm1144, %v1099
    %1150 = vst.msk [vmem:[%s3 + $0x28] sm:$0xff] %vm1144, %v1100
    %1151 = vst.msk [vmem:[%s3 + $0x30] sm:$0xff] %vm1144, %v1101
    %1152 = vst.msk [vmem:[%s3 + $0x38] sm:$0xff] %vm1144, %v1102
    %1153 = vst.msk [vmem:[%s3 + $0x40] sm:$0xff] %vm1144, %v1103
    %1154 = vst.msk [vmem:[%s3 + $0x48] sm:$0xff] %vm1144, %v1104
    %1155 = vst.msk [vmem:[%s3 + $0x50] sm:$0xff] %vm1144, %v1105
    %1156 = vst.msk [vmem:[%s3 + $0x58] sm:$0xff] %vm1144, %v1106
    %1157 = vst.msk [vmem:[%s3 + $0x60] sm:$0xff] %vm1144, %v1107
    %1158 = vst.msk [vmem:[%s3 + $0x68] sm:$0xff] %vm1144, %v1108
    %1159 = vst.msk [vmem:[%s3 + $0x70] sm:$0xff] %vm1144, %v1109
    %1160 = vst.msk [vmem:[%s3 + $0x78] sm:$0xff] %vm1144, %v1110
    %1161 = vst.msk [vmem:[%s3 + $0x80] sm:$0xff] %vm1144, %v1111
    %1162 = vst.msk [vmem:[%s3 + $0x88] sm:$0xff] %vm1144, %v1112
    %1163 = vst.msk [vmem:[%s3 + $0x90] sm:$0xff] %vm1144, %v1113
    %1164 = vst.msk [vmem:[%s3 + $0x98] sm:$0xff] %vm1144, %v1114
    %1165 = vst.msk [vmem:[%s3 + $0xa0] sm:$0xff] %vm1144, %v1115
    %1166 = vst.msk [vmem:[%s3 + $0xa8] sm:$0xff] %vm1144, %v1116
    %1167 = vst.msk [vmem:[%s3 + $0xb0] sm:$0xff] %vm1144, %v1117
    %1168 = vst.msk [vmem:[%s3 + $0xb8] sm:$0xff] %vm1144, %v1118
    %1169 = vst.msk [vmem:[%s3 + $0xc0] sm:$0xff] %vm1144, %v1119
    %1170 = vst.msk [vmem:[%s3 + $0xc8] sm:$0xff] %vm1144, %v1120
    %1171 = vst.msk [vmem:[%s3 + $0xd0] sm:$0xff] %vm1144, %v1121
    %1172 = vst.msk [vmem:[%s3 + $0xd8] sm:$0xff] %vm1144, %v1122
    %1173 = vst.msk [vmem:[%s3 + $0xe0] sm:$0xff] %vm1144, %v1123
    %1174 = vst.msk [vmem:[%s3 + $0xe8] sm:$0xff] %vm1144, %v1124
    %1175 = vst.msk [vmem:[%s3 + $0xf0] sm:$0xff] %vm1144, %v1125
    %1176 = vst.msk [vmem:[%s3 + $0xf8] sm:$0xff] %vm1144, %v1126
    %1177 = vst.msk [vmem:[%s3 + $0x100] sm:$0xff] %vm1144, %v1127
    %1178 = vst.msk [vmem:[%s3 + $0x108] sm:$0xff] %vm1144, %v1128
    %1179 = vst.msk [vmem:[%s3 + $0x110] sm:$0xff] %vm1144, %v1129
    %1180 = vst.msk [vmem:[%s3 + $0x118] sm:$0xff] %vm1144, %v1130
    %1181 = vst.msk [vmem:[%s3 + $0x120] sm:$0xff] %vm1144, %v1131
    %1182 = vst.msk [vmem:[%s3 + $0x128] sm:$0xff] %vm1144, %v1132
    %1183 = vst.msk [vmem:[%s3 + $0x130] sm:$0xff] %vm1144, %v1133
    %1184 = vst.msk [vmem:[%s3 + $0x138] sm:$0xff] %vm1144, %v1134
    %1185 = vst.msk [vmem:[%s3 + $0x140] sm:$0xff] %vm1144, %v1135
    %1186 = vst.msk [vmem:[%s3 + $0x148] sm:$0xff] %vm1144, %v1136
    %1187 = vst.msk [vmem:[%s3 + $0x150] sm:$0xff] %vm1144, %v1137
    %1188 = vst.msk [vmem:[%s3 + $0x158] sm:$0xff] %vm1144, %v1138
    %1189 = vst.msk [vmem:[%s3 + $0x160] sm:$0xff] %vm1144, %v1139
    %1190 = vst.msk [vmem:[%s3 + $0x168] sm:$0xff] %vm1144, %v1140
    %1191 = vst.msk [vmem:[%s3 + $0x170] sm:$0xff] %vm1144, %v1141
    %1192 = vst.msk [vmem:[%s3 + $0x178] sm:$0xff] %vm1144, %v1142
    %1193 = vst.msk [vmem:[%s3 + $0x180] sm:$0xff] %vm1144, %v1143
    // Predicated region
    $region22: #{cnn_forward.2} parent=1 // pred_check
      _
    $region23: #{cnn_forward.2} parent=1 // pred_check_branch
      %1195 = sbr.rel (0) target = $region25
    $region24: #{cnn_forward.2} parent=1 // pred_region
      _
    $region25: #{cnn_forward.2} parent=1 // pred_fallthru
      _
    // Predicated region
    $region26: #{cnn_forward.2} parent=1 // pred_check
      _
    $region27: #{cnn_forward.2} parent=1 // pred_check_branch
      %1197 = sbr.rel (0) target = $region29
    $region28: #{cnn_forward.2} parent=1 // pred_region
      _
    $region29: #{cnn_forward.2} parent=1 // pred_fallthru
      _
    %1198 = vsyncpa [#allocation3], 1
    %1199 = vsyncpa [#allocation5], 1

</llo_original>
